<compile_context>
chip_gen: v7x
topology: tpu7x:2x2x1
jax: 0.10.0
libtpu: 0.0.40
codegen_flags: <defaults>
</compile_context>

<pallas_src>
import jax
import jax.numpy as jnp
from jax import lax
from jax.experimental import pallas as pl
from jax.experimental.pallas import tpu as pltpu

# Module hyperparameters (PyTorch defaults: depth=4, num_conv_kernels=2, unconditional=False)
DEPTH = 4
NUM_KERNELS = 2
EPS = 1e-8


def _make_predictor_kernel(bb: int):
    """Build a kernel processing `bb` batch elements per grid step (bb is static)."""

    def kernel(kattn_ref,    # SMEM (bb, NUM_KERNELS)   softmax(kernel_mod)
               fbias_ref,    # SMEM (1, 1)              logit_w @ res_b + logit_b
               x_ref,        # VMEM (bb, C, HW)         activations, channels on sublanes
               mod_ref,      # VMEM (bb, 1, C)          style modulation
               lw_ref,       # VMEM (DEPTH, NUM_KERNELS, C, C)  adaptive weights (o, i)
               logw_ref,     # VMEM (1, C)              to_logits weight
               fresw_ref,    # VMEM (1, C)              logit_w @ res_w (fused residual)
               out_ref):     # VMEM (bb, 1, HW)
        logit_w = logw_ref[...].astype(jnp.bfloat16)       # (1, C)
        fres_w = fresw_ref[...].astype(jnp.bfloat16)       # (1, C)
        fbias = fbias_ref[0, 0]

        for b in range(bb):                                # static unroll; the per-batch
            x = x_ref[b]                                   # chains are independent so the
            xb = x.astype(jnp.bfloat16)                    # compiler can interleave them
            mod1 = mod_ref[b] + 1.0                        # (1, C): broadcast over out-chan rows

            h = xb                                         # (C, HW) bf16
            for l in range(DEPTH):
                # adaptive kernel selection (attention scalars live in SMEM), f32
                w = kattn_ref[b, 0] * lw_ref[l, 0]
                for n in range(1, NUM_KERNELS):
                    w = w + kattn_ref[b, n] * lw_ref[l, n]
                # modulation along the input-channel (lane) axis, f32
                w = w * mod1
                # demodulation: per output channel inverse norm over input channels, f32
                inv_norm = lax.rsqrt(
                    jnp.maximum(jnp.sum(w * w, axis=1, keepdims=True), EPS))
                w = (w * inv_norm).astype(jnp.bfloat16)    # cast only at the MXU boundary
                # 1x1 conv == W(o,i) @ h(i,HW); bf16 operands, f32 accumulation on the MXU
                h = lax.dot_general(
                    w, h, (((1,), (0,)), ((), ())),
                    preferred_element_type=jnp.float32).astype(jnp.bfloat16)

            # to_logits with the residual path folded in:
            #   logits = logit_w @ h + (logit_w @ res_w) @ x + (logit_w @ res_b + logit_b)
            logits = lax.dot_general(
                logit_w, h, (((1,), (0,)), ((), ())),
                preferred_element_type=jnp.float32)
            logits = logits + lax.dot_general(
                fres_w, xb, (((1,), (0,)), ((), ())),
                preferred_element_type=jnp.float32)
            out_ref[b] = logits + fbias                    # (1, HW): lane-dense store

    return kernel


def _multi_core_chip() -> bool:
    """True on chips where a 'parallel' grid axis shards across TensorCores (v7x, megacore).
    Single-TC v5e/v6e prefer the whole batch folded into one invocation."""
    try:
        kind = jax.devices()[0].device_kind.lower()
    except Exception:
        return False
    return any(tag in kind for tag in ("v7", "v4", "v5p"))


def predictor_forward(x_nchw, mod, kernel_mod, params):
    layer_w, res_w, res_b, logit_w, logit_b = params
    B, C, H, W = x_nchw.shape
    HW = H * W

    # Channels-on-sublanes / pixels-on-lanes: NCHW -> (B, C, HW) is a pure reshape.
    x = x_nchw.reshape(B, C, HW).astype(jnp.float32)
    kattn = jax.nn.softmax(kernel_mod.astype(jnp.float32), axis=-1)   # (B, NUM_KERNELS)
    mod_r = mod.reshape(B, 1, C).astype(jnp.float32)

    # Fold the residual 1x1 conv into to_logits (removes one CxC matmul per batch element).
    fused_res_w = (logit_w @ res_w).astype(jnp.float32)               # (1, C)
    fused_bias = (logit_w @ res_b.T + logit_b).astype(jnp.float32)    # (1, 1)

    # Batch handling per chip generation.
    bb = 1 if _multi_core_chip() else B
    if B % bb:
        bb = 1
    grid = (B // bb,)

    out = pl.pallas_call(
        _make_predictor_kernel(bb),
        out_shape=jax.ShapeDtypeStruct((B, 1, HW), jnp.float32),
        grid=grid,
        in_specs=[
            pl.BlockSpec((bb, NUM_KERNELS), lambda g: (g, 0),
                         memory_space=pltpu.MemorySpace.SMEM),
            pl.BlockSpec((1, 1), lambda g: (0, 0),
                         memory_space=pltpu.MemorySpace.SMEM),
            pl.BlockSpec((bb, C, HW), lambda g: (g, 0, 0)),
            pl.BlockSpec((bb, 1, C), lambda g: (g, 0, 0)),
            pl.BlockSpec((DEPTH, NUM_KERNELS, C, C), lambda g: (0, 0, 0, 0)),
            pl.BlockSpec((1, C), lambda g: (0, 0)),
            pl.BlockSpec((1, C), lambda g: (0, 0)),
        ],
        out_specs=pl.BlockSpec((bb, 1, HW), lambda g: (g, 0, 0)),
        compiler_params=pltpu.CompilerParams(dimension_semantics=("parallel",)),
    )(kattn, fused_bias, x, mod_r, layer_w, logit_w, fused_res_w)

    # (B, 1, HW) -> (B, 1, H, W): pure reshape, matches PyTorch output convention.
    return out.reshape(B, 1, H, W)


def predictor_reference(x_nchw, mod, kernel_mod, params):
    """Pure-JAX f32 reference matching the PyTorch forward pass."""
    layer_w, res_w, res_b, logit_w, logit_b = params
    B, C, H, W = x_nchw.shape
    x = x_nchw.astype(jnp.float32)
    residual = jnp.einsum('bihw,oi->bohw', x, res_w) + res_b.reshape(1, C, 1, 1)
    kattn = jax.nn.softmax(kernel_mod.astype(jnp.float32), axis=-1)
    h = x
    for l in range(DEPTH):
        w = jnp.einsum('bn,noi->boi', kattn, layer_w[l])          # (B, o, i)
        w = w * (mod[:, None, :].astype(jnp.float32) + 1.0)
        inv_norm = lax.rsqrt(jnp.maximum(jnp.sum(w * w, axis=2, keepdims=True), EPS))
        w = w * inv_norm
        h = jnp.einsum('bihw,boi->bohw', h, w)
    h = h + residual
    return jnp.einsum('bihw,oi->bohw', h, logit_w) + logit_b.reshape(1, 1, 1, 1)


def init_params(key, dim):
    k = jax.random.split(key, 5)
    # kaiming-normal-ish (fan_in, leaky_relu) for the adaptive conv kernels (k=1 squeezed)
    layer_w = jax.random.normal(k[0], (DEPTH, NUM_KERNELS, dim, dim), jnp.float32) * (2.0 / dim) ** 0.5
    res_w = jax.random.normal(k[1], (dim, dim), jnp.float32) * (1.0 / dim) ** 0.5
    res_b = jax.random.normal(k[2], (1, dim), jnp.float32) * 0.01
    logit_w = jax.random.normal(k[3], (1, dim), jnp.float32) * (1.0 / dim) ** 0.5
    logit_b = jax.random.normal(k[4], (1, 1), jnp.float32) * 0.01
    return layer_w, res_w, res_b, logit_w, logit_b


if __name__ == "__main__":
    B, C, H, W = 2, 32, 16, 16   # H*W = 256: lane-dense (multiple of 128)

    root = jax.random.PRNGKey(0)
    kp, kx, km, kk = jax.random.split(root, 4)
    params = init_params(kp, C)

    x = jax.random.normal(kx, (B, C, H, W), jnp.float32)
    mod = jax.random.normal(km, (B, C), jnp.float32)
    kernel_mod = jax.random.normal(kk, (B, NUM_KERNELS), jnp.float32)

    out = predictor_forward(x, mod, kernel_mod, params)
    jax.block_until_ready(out)

    ref = predictor_reference(x, mod, kernel_mod, params)
    err = float(jnp.max(jnp.abs(out - ref)))
    assert out.shape == (B, 1, H, W), out.shape
    # bf16 MXU operands (f32 accumulation) -> slightly looser tolerance than pure f32.
    assert err < 5e-2, f"max abs error {err}"

    print("KERNEL_OK")
</pallas_src>

<mosaic_0001>
module attributes {stable_mosaic.version = 11 : i64} {
  func.func @kernel(%arg0: i32, %arg1: memref<2x2xf32, #tpu.memory_space<smem>>, %arg2: memref<1x1xf32, #tpu.memory_space<smem>>, %arg3: memref<2x32x256xf32, #tpu.memory_space<vmem>>, %arg4: memref<2x1x32xf32, #tpu.memory_space<vmem>>, %arg5: memref<4x2x32x32xf32, #tpu.memory_space<vmem>>, %arg6: memref<1x32xf32, #tpu.memory_space<vmem>>, %arg7: memref<1x32xf32, #tpu.memory_space<vmem>>, %arg8: memref<2x1x256xf32, #tpu.memory_space<vmem>>) attributes {dimension_semantics = [#tpu.dimension_semantics<parallel>], iteration_bounds = array<i64: 1>, scalar_prefetch = 0 : i64, scratch_operands = 0 : i64, tpu.core_type = #tpu.core_type<tc>, window_params = [{transform_indices = @transform_0, window_bounds = array<i64: 2, 2>}, {transform_indices = @transform_1, window_bounds = array<i64: 1, 1>}, {transform_indices = @transform_2, window_bounds = array<i64: 2, 32, 256>}, {transform_indices = @transform_3, window_bounds = array<i64: 2, 1, 32>}, {pipeline_mode = #tpu.pipeline_mode<synchronous>, transform_indices = @transform_4, window_bounds = array<i64: 4, 2, 32, 32>}, {pipeline_mode = #tpu.pipeline_mode<synchronous>, transform_indices = @transform_5, window_bounds = array<i64: 1, 32>}, {pipeline_mode = #tpu.pipeline_mode<synchronous>, transform_indices = @transform_6, window_bounds = array<i64: 1, 32>}, {transform_indices = @transform_7, window_bounds = array<i64: 2, 1, 256>}]} {
    %c0 = arith.constant 0 : index
    %c0_0 = arith.constant 0 : index
    %0 = vector.load %arg6[%c0, %c0_0] : memref<1x32xf32, #tpu.memory_space<vmem>>, vector<1x32xf32>
    %1 = arith.truncf %0 : vector<1x32xf32> to vector<1x32xbf16>
    %c0_1 = arith.constant 0 : index
    %c0_2 = arith.constant 0 : index
    %2 = vector.load %arg7[%c0_1, %c0_2] : memref<1x32xf32, #tpu.memory_space<vmem>>, vector<1x32xf32>
    %3 = arith.truncf %2 : vector<1x32xf32> to vector<1x32xbf16>
    %c0_3 = arith.constant 0 : index
    %c0_4 = arith.constant 0 : index
    %4 = memref.load %arg2[%c0_3, %c0_4] : memref<1x1xf32, #tpu.memory_space<smem>>
    %c0_5 = arith.constant 0 : index
    %c0_6 = arith.constant 0 : index
    %c0_7 = arith.constant 0 : index
    %5 = vector.load %arg3[%c0_5, %c0_6, %c0_7] : memref<2x32x256xf32, #tpu.memory_space<vmem>>, vector<1x32x256xf32>
    %6 = vector.shape_cast %5 : vector<1x32x256xf32> to vector<32x256xf32>
    %7 = arith.truncf %6 : vector<32x256xf32> to vector<32x256xbf16>
    %c0_8 = arith.constant 0 : index
    %c0_9 = arith.constant 0 : index
    %c0_10 = arith.constant 0 : index
    %8 = vector.load %arg4[%c0_8, %c0_9, %c0_10] : memref<2x1x32xf32, #tpu.memory_space<vmem>>, vector<1x1x32xf32>
    %9 = vector.shape_cast %8 : vector<1x1x32xf32> to vector<1x32xf32>
    %cst = arith.constant 1.000000e+00 : f32
    %10 = vector.broadcast %cst : f32 to vector<1x32xf32>
    %11 = arith.addf %9, %10 : vector<1x32xf32>
    %c0_11 = arith.constant 0 : index
    %c0_12 = arith.constant 0 : index
    %12 = memref.load %arg1[%c0_11, %c0_12] : memref<2x2xf32, #tpu.memory_space<smem>>
    %c0_13 = arith.constant 0 : index
    %c0_14 = arith.constant 0 : index
    %c0_15 = arith.constant 0 : index
    %c0_16 = arith.constant 0 : index
    %13 = vector.load %arg5[%c0_13, %c0_14, %c0_15, %c0_16] : memref<4x2x32x32xf32, #tpu.memory_space<vmem>>, vector<1x1x32x32xf32>
    %14 = vector.shape_cast %13 : vector<1x1x32x32xf32> to vector<32x32xf32>
    %15 = vector.broadcast %12 : f32 to vector<32x32xf32>
    %16 = arith.mulf %15, %14 : vector<32x32xf32>
    %c0_17 = arith.constant 0 : index
    %c1 = arith.constant 1 : index
    %17 = memref.load %arg1[%c0_17, %c1] : memref<2x2xf32, #tpu.memory_space<smem>>
    %c0_18 = arith.constant 0 : index
    %c1_19 = arith.constant 1 : index
    %c0_20 = arith.constant 0 : index
    %c0_21 = arith.constant 0 : index
    %18 = vector.load %arg5[%c0_18, %c1_19, %c0_20, %c0_21] : memref<4x2x32x32xf32, #tpu.memory_space<vmem>>, vector<1x1x32x32xf32>
    %19 = vector.shape_cast %18 : vector<1x1x32x32xf32> to vector<32x32xf32>
    %20 = vector.broadcast %17 : f32 to vector<32x32xf32>
    %21 = arith.mulf %20, %19 : vector<32x32xf32>
    %22 = arith.addf %16, %21 : vector<32x32xf32>
    %23 = vector.broadcast %11 : vector<1x32xf32> to vector<32x32xf32>
    %24 = arith.mulf %22, %23 : vector<32x32xf32>
    %25 = arith.mulf %24, %24 : vector<32x32xf32>
    %cst_22 = arith.constant dense<0.000000e+00> : vector<32xf32>
    %26 = vector.multi_reduction <add>, %25, %cst_22 [1] : vector<32x32xf32> to vector<32xf32>
    %27 = vector.shape_cast %26 : vector<32xf32> to vector<32x1xf32>
    %cst_23 = arith.constant 9.99999993E-9 : f32
    %28 = vector.broadcast %cst_23 : f32 to vector<32x1xf32>
    %29 = arith.maximumf %27, %28 : vector<32x1xf32>
    %30 = math.rsqrt %29 : vector<32x1xf32>
    %31 = vector.broadcast %30 : vector<32x1xf32> to vector<32x32xf32>
    %32 = arith.mulf %24, %31 : vector<32x32xf32>
    %33 = arith.truncf %32 : vector<32x32xf32> to vector<32x32xbf16>
    %cst_24 = arith.constant dense<0.000000e+00> : vector<32x256xf32>
    %34 = tpu.matmul %33, %7, %cst_24 {dimension_numbers = #tpu.dot_dimension_numbers<[1], [0], [0], [1], [0, 0, 1, 1], [], []>} : vector<32x32xbf16>, vector<32x256xbf16>, vector<32x256xf32> -> vector<32x256xf32>
    %35 = arith.truncf %34 : vector<32x256xf32> to vector<32x256xbf16>
    %c0_25 = arith.constant 0 : index
    %c0_26 = arith.constant 0 : index
    %36 = memref.load %arg1[%c0_25, %c0_26] : memref<2x2xf32, #tpu.memory_space<smem>>
    %c1_27 = arith.constant 1 : index
    %c0_28 = arith.constant 0 : index
    %c0_29 = arith.constant 0 : index
    %c0_30 = arith.constant 0 : index
    %37 = vector.load %arg5[%c1_27, %c0_28, %c0_29, %c0_30] : memref<4x2x32x32xf32, #tpu.memory_space<vmem>>, vector<1x1x32x32xf32>
    %38 = vector.shape_cast %37 : vector<1x1x32x32xf32> to vector<32x32xf32>
    %39 = vector.broadcast %36 : f32 to vector<32x32xf32>
    %40 = arith.mulf %39, %38 : vector<32x32xf32>
    %c0_31 = arith.constant 0 : index
    %c1_32 = arith.constant 1 : index
    %41 = memref.load %arg1[%c0_31, %c1_32] : memref<2x2xf32, #tpu.memory_space<smem>>
    %c1_33 = arith.constant 1 : index
    %c1_34 = arith.constant 1 : index
    %c0_35 = arith.constant 0 : index
    %c0_36 = arith.constant 0 : index
    %42 = vector.load %arg5[%c1_33, %c1_34, %c0_35, %c0_36] : memref<4x2x32x32xf32, #tpu.memory_space<vmem>>, vector<1x1x32x32xf32>
    %43 = vector.shape_cast %42 : vector<1x1x32x32xf32> to vector<32x32xf32>
    %44 = vector.broadcast %41 : f32 to vector<32x32xf32>
    %45 = arith.mulf %44, %43 : vector<32x32xf32>
    %46 = arith.addf %40, %45 : vector<32x32xf32>
    %47 = vector.broadcast %11 : vector<1x32xf32> to vector<32x32xf32>
    %48 = arith.mulf %46, %47 : vector<32x32xf32>
    %49 = arith.mulf %48, %48 : vector<32x32xf32>
    %cst_37 = arith.constant dense<0.000000e+00> : vector<32xf32>
    %50 = vector.multi_reduction <add>, %49, %cst_37 [1] : vector<32x32xf32> to vector<32xf32>
    %51 = vector.shape_cast %50 : vector<32xf32> to vector<32x1xf32>
    %cst_38 = arith.constant 9.99999993E-9 : f32
    %52 = vector.broadcast %cst_38 : f32 to vector<32x1xf32>
    %53 = arith.maximumf %51, %52 : vector<32x1xf32>
    %54 = math.rsqrt %53 : vector<32x1xf32>
    %55 = vector.broadcast %54 : vector<32x1xf32> to vector<32x32xf32>
    %56 = arith.mulf %48, %55 : vector<32x32xf32>
    %57 = arith.truncf %56 : vector<32x32xf32> to vector<32x32xbf16>
    %cst_39 = arith.constant dense<0.000000e+00> : vector<32x256xf32>
    %58 = tpu.matmul %57, %35, %cst_39 {dimension_numbers = #tpu.dot_dimension_numbers<[1], [0], [0], [1], [0, 0, 1, 1], [], []>} : vector<32x32xbf16>, vector<32x256xbf16>, vector<32x256xf32> -> vector<32x256xf32>
    %59 = arith.truncf %58 : vector<32x256xf32> to vector<32x256xbf16>
    %c0_40 = arith.constant 0 : index
    %c0_41 = arith.constant 0 : index
    %60 = memref.load %arg1[%c0_40, %c0_41] : memref<2x2xf32, #tpu.memory_space<smem>>
    %c2 = arith.constant 2 : index
    %c0_42 = arith.constant 0 : index
    %c0_43 = arith.constant 0 : index
    %c0_44 = arith.constant 0 : index
    %61 = vector.load %arg5[%c2, %c0_42, %c0_43, %c0_44] : memref<4x2x32x32xf32, #tpu.memory_space<vmem>>, vector<1x1x32x32xf32>
    %62 = vector.shape_cast %61 : vector<1x1x32x32xf32> to vector<32x32xf32>
    %63 = vector.broadcast %60 : f32 to vector<32x32xf32>
    %64 = arith.mulf %63, %62 : vector<32x32xf32>
    %c0_45 = arith.constant 0 : index
    %c1_46 = arith.constant 1 : index
    %65 = memref.load %arg1[%c0_45, %c1_46] : memref<2x2xf32, #tpu.memory_space<smem>>
    %c2_47 = arith.constant 2 : index
    %c1_48 = arith.constant 1 : index
    %c0_49 = arith.constant 0 : index
    %c0_50 = arith.constant 0 : index
    %66 = vector.load %arg5[%c2_47, %c1_48, %c0_49, %c0_50] : memref<4x2x32x32xf32, #tpu.memory_space<vmem>>, vector<1x1x32x32xf32>
    %67 = vector.shape_cast %66 : vector<1x1x32x32xf32> to vector<32x32xf32>
    %68 = vector.broadcast %65 : f32 to vector<32x32xf32>
    %69 = arith.mulf %68, %67 : vector<32x32xf32>
    %70 = arith.addf %64, %69 : vector<32x32xf32>
    %71 = vector.broadcast %11 : vector<1x32xf32> to vector<32x32xf32>
    %72 = arith.mulf %70, %71 : vector<32x32xf32>
    %73 = arith.mulf %72, %72 : vector<32x32xf32>
    %cst_51 = arith.constant dense<0.000000e+00> : vector<32xf32>
    %74 = vector.multi_reduction <add>, %73, %cst_51 [1] : vector<32x32xf32> to vector<32xf32>
    %75 = vector.shape_cast %74 : vector<32xf32> to vector<32x1xf32>
    %cst_52 = arith.constant 9.99999993E-9 : f32
    %76 = vector.broadcast %cst_52 : f32 to vector<32x1xf32>
    %77 = arith.maximumf %75, %76 : vector<32x1xf32>
    %78 = math.rsqrt %77 : vector<32x1xf32>
    %79 = vector.broadcast %78 : vector<32x1xf32> to vector<32x32xf32>
    %80 = arith.mulf %72, %79 : vector<32x32xf32>
    %81 = arith.truncf %80 : vector<32x32xf32> to vector<32x32xbf16>
    %cst_53 = arith.constant dense<0.000000e+00> : vector<32x256xf32>
    %82 = tpu.matmul %81, %59, %cst_53 {dimension_numbers = #tpu.dot_dimension_numbers<[1], [0], [0], [1], [0, 0, 1, 1], [], []>} : vector<32x32xbf16>, vector<32x256xbf16>, vector<32x256xf32> -> vector<32x256xf32>
    %83 = arith.truncf %82 : vector<32x256xf32> to vector<32x256xbf16>
    %c0_54 = arith.constant 0 : index
    %c0_55 = arith.constant 0 : index
    %84 = memref.load %arg1[%c0_54, %c0_55] : memref<2x2xf32, #tpu.memory_space<smem>>
    %c3 = arith.constant 3 : index
    %c0_56 = arith.constant 0 : index
    %c0_57 = arith.constant 0 : index
    %c0_58 = arith.constant 0 : index
    %85 = vector.load %arg5[%c3, %c0_56, %c0_57, %c0_58] : memref<4x2x32x32xf32, #tpu.memory_space<vmem>>, vector<1x1x32x32xf32>
    %86 = vector.shape_cast %85 : vector<1x1x32x32xf32> to vector<32x32xf32>
    %87 = vector.broadcast %84 : f32 to vector<32x32xf32>
    %88 = arith.mulf %87, %86 : vector<32x32xf32>
    %c0_59 = arith.constant 0 : index
    %c1_60 = arith.constant 1 : index
    %89 = memref.load %arg1[%c0_59, %c1_60] : memref<2x2xf32, #tpu.memory_space<smem>>
    %c3_61 = arith.constant 3 : index
    %c1_62 = arith.constant 1 : index
    %c0_63 = arith.constant 0 : index
    %c0_64 = arith.constant 0 : index
    %90 = vector.load %arg5[%c3_61, %c1_62, %c0_63, %c0_64] : memref<4x2x32x32xf32, #tpu.memory_space<vmem>>, vector<1x1x32x32xf32>
    %91 = vector.shape_cast %90 : vector<1x1x32x32xf32> to vector<32x32xf32>
    %92 = vector.broadcast %89 : f32 to vector<32x32xf32>
    %93 = arith.mulf %92, %91 : vector<32x32xf32>
    %94 = arith.addf %88, %93 : vector<32x32xf32>
    %95 = vector.broadcast %11 : vector<1x32xf32> to vector<32x32xf32>
    %96 = arith.mulf %94, %95 : vector<32x32xf32>
    %97 = arith.mulf %96, %96 : vector<32x32xf32>
    %cst_65 = arith.constant dense<0.000000e+00> : vector<32xf32>
    %98 = vector.multi_reduction <add>, %97, %cst_65 [1] : vector<32x32xf32> to vector<32xf32>
    %99 = vector.shape_cast %98 : vector<32xf32> to vector<32x1xf32>
    %cst_66 = arith.constant 9.99999993E-9 : f32
    %100 = vector.broadcast %cst_66 : f32 to vector<32x1xf32>
    %101 = arith.maximumf %99, %100 : vector<32x1xf32>
    %102 = math.rsqrt %101 : vector<32x1xf32>
    %103 = vector.broadcast %102 : vector<32x1xf32> to vector<32x32xf32>
    %104 = arith.mulf %96, %103 : vector<32x32xf32>
    %105 = arith.truncf %104 : vector<32x32xf32> to vector<32x32xbf16>
    %cst_67 = arith.constant dense<0.000000e+00> : vector<32x256xf32>
    %106 = tpu.matmul %105, %83, %cst_67 {dimension_numbers = #tpu.dot_dimension_numbers<[1], [0], [0], [1], [0, 0, 1, 1], [], []>} : vector<32x32xbf16>, vector<32x256xbf16>, vector<32x256xf32> -> vector<32x256xf32>
    %107 = arith.truncf %106 : vector<32x256xf32> to vector<32x256xbf16>
    %cst_68 = arith.constant dense<0.000000e+00> : vector<1x256xf32>
    %108 = tpu.matmul %1, %107, %cst_68 {dimension_numbers = #tpu.dot_dimension_numbers<[1], [0], [0], [1], [0, 0, 1, 1], [], []>} : vector<1x32xbf16>, vector<32x256xbf16>, vector<1x256xf32> -> vector<1x256xf32>
    %cst_69 = arith.constant dense<0.000000e+00> : vector<1x256xf32>
    %109 = tpu.matmul %3, %7, %cst_69 {dimension_numbers = #tpu.dot_dimension_numbers<[1], [0], [0], [1], [0, 0, 1, 1], [], []>} : vector<1x32xbf16>, vector<32x256xbf16>, vector<1x256xf32> -> vector<1x256xf32>
    %110 = arith.addf %108, %109 : vector<1x256xf32>
    %111 = vector.broadcast %4 : f32 to vector<1x256xf32>
    %112 = arith.addf %110, %111 : vector<1x256xf32>
    %c0_70 = arith.constant 0 : index
    %c0_71 = arith.constant 0 : index
    %c0_72 = arith.constant 0 : index
    %113 = vector.load %arg8[%c0_70, %c0_71, %c0_72] : memref<2x1x256xf32, #tpu.memory_space<vmem>>, vector<1x1x256xf32>
    %114 = vector.shape_cast %113 : vector<1x1x256xf32> to vector<1x256xf32>
    %115 = vector.shape_cast %112 : vector<1x256xf32> to vector<1x1x256xf32>
    tpu.vector_store %arg8[%c0_70, %c0_71, %c0_72], %115 {strides = array<i32>} : memref<2x1x256xf32, #tpu.memory_space<vmem>>, vector<1x1x256xf32>,
    %c1_73 = arith.constant 1 : index
    %c0_74 = arith.constant 0 : index
    %c0_75 = arith.constant 0 : index
    %116 = vector.load %arg3[%c1_73, %c0_74, %c0_75] : memref<2x32x256xf32, #tpu.memory_space<vmem>>, vector<1x32x256xf32>
    %117 = vector.shape_cast %116 : vector<1x32x256xf32> to vector<32x256xf32>
    %118 = arith.truncf %117 : vector<32x256xf32> to vector<32x256xbf16>
    %c1_76 = arith.constant 1 : index
    %c0_77 = arith.constant 0 : index
    %c0_78 = arith.constant 0 : index
    %119 = vector.load %arg4[%c1_76, %c0_77, %c0_78] : memref<2x1x32xf32, #tpu.memory_space<vmem>>, vector<1x1x32xf32>
    %120 = vector.shape_cast %119 : vector<1x1x32xf32> to vector<1x32xf32>
    %cst_79 = arith.constant 1.000000e+00 : f32
    %121 = vector.broadcast %cst_79 : f32 to vector<1x32xf32>
    %122 = arith.addf %120, %121 : vector<1x32xf32>
    %c1_80 = arith.constant 1 : index
    %c0_81 = arith.constant 0 : index
    %123 = memref.load %arg1[%c1_80, %c0_81] : memref<2x2xf32, #tpu.memory_space<smem>>
    %c0_82 = arith.constant 0 : index
    %c0_83 = arith.constant 0 : index
    %c0_84 = arith.constant 0 : index
    %c0_85 = arith.constant 0 : index
    %124 = vector.load %arg5[%c0_82, %c0_83, %c0_84, %c0_85] : memref<4x2x32x32xf32, #tpu.memory_space<vmem>>, vector<1x1x32x32xf32>
    %125 = vector.shape_cast %124 : vector<1x1x32x32xf32> to vector<32x32xf32>
    %126 = vector.broadcast %123 : f32 to vector<32x32xf32>
    %127 = arith.mulf %126, %125 : vector<32x32xf32>
    %c1_86 = arith.constant 1 : index
    %c1_87 = arith.constant 1 : index
    %128 = memref.load %arg1[%c1_86, %c1_87] : memref<2x2xf32, #tpu.memory_space<smem>>
    %c0_88 = arith.constant 0 : index
    %c1_89 = arith.constant 1 : index
    %c0_90 = arith.constant 0 : index
    %c0_91 = arith.constant 0 : index
    %129 = vector.load %arg5[%c0_88, %c1_89, %c0_90, %c0_91] : memref<4x2x32x32xf32, #tpu.memory_space<vmem>>, vector<1x1x32x32xf32>
    %130 = vector.shape_cast %129 : vector<1x1x32x32xf32> to vector<32x32xf32>
    %131 = vector.broadcast %128 : f32 to vector<32x32xf32>
    %132 = arith.mulf %131, %130 : vector<32x32xf32>
    %133 = arith.addf %127, %132 : vector<32x32xf32>
    %134 = vector.broadcast %122 : vector<1x32xf32> to vector<32x32xf32>
    %135 = arith.mulf %133, %134 : vector<32x32xf32>
    %136 = arith.mulf %135, %135 : vector<32x32xf32>
    %cst_92 = arith.constant dense<0.000000e+00> : vector<32xf32>
    %137 = vector.multi_reduction <add>, %136, %cst_92 [1] : vector<32x32xf32> to vector<32xf32>
    %138 = vector.shape_cast %137 : vector<32xf32> to vector<32x1xf32>
    %cst_93 = arith.constant 9.99999993E-9 : f32
    %139 = vector.broadcast %cst_93 : f32 to vector<32x1xf32>
    %140 = arith.maximumf %138, %139 : vector<32x1xf32>
    %141 = math.rsqrt %140 : vector<32x1xf32>
    %142 = vector.broadcast %141 : vector<32x1xf32> to vector<32x32xf32>
    %143 = arith.mulf %135, %142 : vector<32x32xf32>
    %144 = arith.truncf %143 : vector<32x32xf32> to vector<32x32xbf16>
    %cst_94 = arith.constant dense<0.000000e+00> : vector<32x256xf32>
    %145 = tpu.matmul %144, %118, %cst_94 {dimension_numbers = #tpu.dot_dimension_numbers<[1], [0], [0], [1], [0, 0, 1, 1], [], []>} : vector<32x32xbf16>, vector<32x256xbf16>, vector<32x256xf32> -> vector<32x256xf32>
    %146 = arith.truncf %145 : vector<32x256xf32> to vector<32x256xbf16>
    %c1_95 = arith.constant 1 : index
    %c0_96 = arith.constant 0 : index
    %147 = memref.load %arg1[%c1_95, %c0_96] : memref<2x2xf32, #tpu.memory_space<smem>>
    %c1_97 = arith.constant 1 : index
    %c0_98 = arith.constant 0 : index
    %c0_99 = arith.constant 0 : index
    %c0_100 = arith.constant 0 : index
    %148 = vector.load %arg5[%c1_97, %c0_98, %c0_99, %c0_100] : memref<4x2x32x32xf32, #tpu.memory_space<vmem>>, vector<1x1x32x32xf32>
    %149 = vector.shape_cast %148 : vector<1x1x32x32xf32> to vector<32x32xf32>
    %150 = vector.broadcast %147 : f32 to vector<32x32xf32>
    %151 = arith.mulf %150, %149 : vector<32x32xf32>
    %c1_101 = arith.constant 1 : index
    %c1_102 = arith.constant 1 : index
    %152 = memref.load %arg1[%c1_101, %c1_102] : memref<2x2xf32, #tpu.memory_space<smem>>
    %c1_103 = arith.constant 1 : index
    %c1_104 = arith.constant 1 : index
    %c0_105 = arith.constant 0 : index
    %c0_106 = arith.constant 0 : index
    %153 = vector.load %arg5[%c1_103, %c1_104, %c0_105, %c0_106] : memref<4x2x32x32xf32, #tpu.memory_space<vmem>>, vector<1x1x32x32xf32>
    %154 = vector.shape_cast %153 : vector<1x1x32x32xf32> to vector<32x32xf32>
    %155 = vector.broadcast %152 : f32 to vector<32x32xf32>
    %156 = arith.mulf %155, %154 : vector<32x32xf32>
    %157 = arith.addf %151, %156 : vector<32x32xf32>
    %158 = vector.broadcast %122 : vector<1x32xf32> to vector<32x32xf32>
    %159 = arith.mulf %157, %158 : vector<32x32xf32>
    %160 = arith.mulf %159, %159 : vector<32x32xf32>
    %cst_107 = arith.constant dense<0.000000e+00> : vector<32xf32>
    %161 = vector.multi_reduction <add>, %160, %cst_107 [1] : vector<32x32xf32> to vector<32xf32>
    %162 = vector.shape_cast %161 : vector<32xf32> to vector<32x1xf32>
    %cst_108 = arith.constant 9.99999993E-9 : f32
    %163 = vector.broadcast %cst_108 : f32 to vector<32x1xf32>
    %164 = arith.maximumf %162, %163 : vector<32x1xf32>
    %165 = math.rsqrt %164 : vector<32x1xf32>
    %166 = vector.broadcast %165 : vector<32x1xf32> to vector<32x32xf32>
    %167 = arith.mulf %159, %166 : vector<32x32xf32>
    %168 = arith.truncf %167 : vector<32x32xf32> to vector<32x32xbf16>
    %cst_109 = arith.constant dense<0.000000e+00> : vector<32x256xf32>
    %169 = tpu.matmul %168, %146, %cst_109 {dimension_numbers = #tpu.dot_dimension_numbers<[1], [0], [0], [1], [0, 0, 1, 1], [], []>} : vector<32x32xbf16>, vector<32x256xbf16>, vector<32x256xf32> -> vector<32x256xf32>
    %170 = arith.truncf %169 : vector<32x256xf32> to vector<32x256xbf16>
    %c1_110 = arith.constant 1 : index
    %c0_111 = arith.constant 0 : index
    %171 = memref.load %arg1[%c1_110, %c0_111] : memref<2x2xf32, #tpu.memory_space<smem>>
    %c2_112 = arith.constant 2 : index
    %c0_113 = arith.constant 0 : index
    %c0_114 = arith.constant 0 : index
    %c0_115 = arith.constant 0 : index
    %172 = vector.load %arg5[%c2_112, %c0_113, %c0_114, %c0_115] : memref<4x2x32x32xf32, #tpu.memory_space<vmem>>, vector<1x1x32x32xf32>
    %173 = vector.shape_cast %172 : vector<1x1x32x32xf32> to vector<32x32xf32>
    %174 = vector.broadcast %171 : f32 to vector<32x32xf32>
    %175 = arith.mulf %174, %173 : vector<32x32xf32>
    %c1_116 = arith.constant 1 : index
    %c1_117 = arith.constant 1 : index
    %176 = memref.load %arg1[%c1_116, %c1_117] : memref<2x2xf32, #tpu.memory_space<smem>>
    %c2_118 = arith.constant 2 : index
    %c1_119 = arith.constant 1 : index
    %c0_120 = arith.constant 0 : index
    %c0_121 = arith.constant 0 : index
    %177 = vector.load %arg5[%c2_118, %c1_119, %c0_120, %c0_121] : memref<4x2x32x32xf32, #tpu.memory_space<vmem>>, vector<1x1x32x32xf32>
    %178 = vector.shape_cast %177 : vector<1x1x32x32xf32> to vector<32x32xf32>
    %179 = vector.broadcast %176 : f32 to vector<32x32xf32>
    %180 = arith.mulf %179, %178 : vector<32x32xf32>
    %181 = arith.addf %175, %180 : vector<32x32xf32>
    %182 = vector.broadcast %122 : vector<1x32xf32> to vector<32x32xf32>
    %183 = arith.mulf %181, %182 : vector<32x32xf32>
    %184 = arith.mulf %183, %183 : vector<32x32xf32>
    %cst_122 = arith.constant dense<0.000000e+00> : vector<32xf32>
    %185 = vector.multi_reduction <add>, %184, %cst_122 [1] : vector<32x32xf32> to vector<32xf32>
    %186 = vector.shape_cast %185 : vector<32xf32> to vector<32x1xf32>
    %cst_123 = arith.constant 9.99999993E-9 : f32
    %187 = vector.broadcast %cst_123 : f32 to vector<32x1xf32>
    %188 = arith.maximumf %186, %187 : vector<32x1xf32>
    %189 = math.rsqrt %188 : vector<32x1xf32>
    %190 = vector.broadcast %189 : vector<32x1xf32> to vector<32x32xf32>
    %191 = arith.mulf %183, %190 : vector<32x32xf32>
    %192 = arith.truncf %191 : vector<32x32xf32> to vector<32x32xbf16>
    %cst_124 = arith.constant dense<0.000000e+00> : vector<32x256xf32>
    %193 = tpu.matmul %192, %170, %cst_124 {dimension_numbers = #tpu.dot_dimension_numbers<[1], [0], [0], [1], [0, 0, 1, 1], [], []>} : vector<32x32xbf16>, vector<32x256xbf16>, vector<32x256xf32> -> vector<32x256xf32>
    %194 = arith.truncf %193 : vector<32x256xf32> to vector<32x256xbf16>
    %c1_125 = arith.constant 1 : index
    %c0_126 = arith.constant 0 : index
    %195 = memref.load %arg1[%c1_125, %c0_126] : memref<2x2xf32, #tpu.memory_space<smem>>
    %c3_127 = arith.constant 3 : index
    %c0_128 = arith.constant 0 : index
    %c0_129 = arith.constant 0 : index
    %c0_130 = arith.constant 0 : index
    %196 = vector.load %arg5[%c3_127, %c0_128, %c0_129, %c0_130] : memref<4x2x32x32xf32, #tpu.memory_space<vmem>>, vector<1x1x32x32xf32>
    %197 = vector.shape_cast %196 : vector<1x1x32x32xf32> to vector<32x32xf32>
    %198 = vector.broadcast %195 : f32 to vector<32x32xf32>
    %199 = arith.mulf %198, %197 : vector<32x32xf32>
    %c1_131 = arith.constant 1 : index
    %c1_132 = arith.constant 1 : index
    %200 = memref.load %arg1[%c1_131, %c1_132] : memref<2x2xf32, #tpu.memory_space<smem>>
    %c3_133 = arith.constant 3 : index
    %c1_134 = arith.constant 1 : index
    %c0_135 = arith.constant 0 : index
    %c0_136 = arith.constant 0 : index
    %201 = vector.load %arg5[%c3_133, %c1_134, %c0_135, %c0_136] : memref<4x2x32x32xf32, #tpu.memory_space<vmem>>, vector<1x1x32x32xf32>
    %202 = vector.shape_cast %201 : vector<1x1x32x32xf32> to vector<32x32xf32>
    %203 = vector.broadcast %200 : f32 to vector<32x32xf32>
    %204 = arith.mulf %203, %202 : vector<32x32xf32>
    %205 = arith.addf %199, %204 : vector<32x32xf32>
    %206 = vector.broadcast %122 : vector<1x32xf32> to vector<32x32xf32>
    %207 = arith.mulf %205, %206 : vector<32x32xf32>
    %208 = arith.mulf %207, %207 : vector<32x32xf32>
    %cst_137 = arith.constant dense<0.000000e+00> : vector<32xf32>
    %209 = vector.multi_reduction <add>, %208, %cst_137 [1] : vector<32x32xf32> to vector<32xf32>
    %210 = vector.shape_cast %209 : vector<32xf32> to vector<32x1xf32>
    %cst_138 = arith.constant 9.99999993E-9 : f32
    %211 = vector.broadcast %cst_138 : f32 to vector<32x1xf32>
    %212 = arith.maximumf %210, %211 : vector<32x1xf32>
    %213 = math.rsqrt %212 : vector<32x1xf32>
    %214 = vector.broadcast %213 : vector<32x1xf32> to vector<32x32xf32>
    %215 = arith.mulf %207, %214 : vector<32x32xf32>
    %216 = arith.truncf %215 : vector<32x32xf32> to vector<32x32xbf16>
    %cst_139 = arith.constant dense<0.000000e+00> : vector<32x256xf32>
    %217 = tpu.matmul %216, %194, %cst_139 {dimension_numbers = #tpu.dot_dimension_numbers<[1], [0], [0], [1], [0, 0, 1, 1], [], []>} : vector<32x32xbf16>, vector<32x256xbf16>, vector<32x256xf32> -> vector<32x256xf32>
    %218 = arith.truncf %217 : vector<32x256xf32> to vector<32x256xbf16>
    %cst_140 = arith.constant dense<0.000000e+00> : vector<1x256xf32>
    %219 = tpu.matmul %1, %218, %cst_140 {dimension_numbers = #tpu.dot_dimension_numbers<[1], [0], [0], [1], [0, 0, 1, 1], [], []>} : vector<1x32xbf16>, vector<32x256xbf16>, vector<1x256xf32> -> vector<1x256xf32>
    %cst_141 = arith.constant dense<0.000000e+00> : vector<1x256xf32>
    %220 = tpu.matmul %3, %118, %cst_141 {dimension_numbers = #tpu.dot_dimension_numbers<[1], [0], [0], [1], [0, 0, 1, 1], [], []>} : vector<1x32xbf16>, vector<32x256xbf16>, vector<1x256xf32> -> vector<1x256xf32>
    %221 = arith.addf %219, %220 : vector<1x256xf32>
    %222 = vector.broadcast %4 : f32 to vector<1x256xf32>
    %223 = arith.addf %221, %222 : vector<1x256xf32>
    %c1_142 = arith.constant 1 : index
    %c0_143 = arith.constant 0 : index
    %c0_144 = arith.constant 0 : index
    %224 = vector.load %arg8[%c1_142, %c0_143, %c0_144] : memref<2x1x256xf32, #tpu.memory_space<vmem>>, vector<1x1x256xf32>
    %225 = vector.shape_cast %224 : vector<1x1x256xf32> to vector<1x256xf32>
    %226 = vector.shape_cast %223 : vector<1x256xf32> to vector<1x1x256xf32>
    tpu.vector_store %arg8[%c1_142, %c0_143, %c0_144], %226 {strides = array<i32>} : memref<2x1x256xf32, #tpu.memory_space<vmem>>, vector<1x1x256xf32>,
    return
  }
  func.func @transform_0(%arg0: i32) -> (i32, i32) {
    %c0_i32 = arith.constant 0 : i32
    %c0_i32_0 = arith.constant 0 : i32
    return %arg0, %c0_i32 : i32, i32
  }
  func.func @transform_1(%arg0: i32) -> (i32, i32) {
    %c0_i32 = arith.constant 0 : i32
    %c0_i32_0 = arith.constant 0 : i32
    %c0_i32_1 = arith.constant 0 : i32
    return %c0_i32, %c0_i32_0 : i32, i32
  }
  func.func @transform_2(%arg0: i32) -> (i32, i32, i32) {
    %c0_i32 = arith.constant 0 : i32
    %c0_i32_0 = arith.constant 0 : i32
    %c0_i32_1 = arith.constant 0 : i32
    return %arg0, %c0_i32, %c0_i32_0 : i32, i32, i32
  }
  func.func @transform_3(%arg0: i32) -> (i32, i32, i32) {
    %c0_i32 = arith.constant 0 : i32
    %c0_i32_0 = arith.constant 0 : i32
    %c0_i32_1 = arith.constant 0 : i32
    return %arg0, %c0_i32, %c0_i32_0 : i32, i32, i32
  }
  func.func @transform_4(%arg0: i32) -> (i32, i32, i32, i32) {
    %c0_i32 = arith.constant 0 : i32
    %c0_i32_0 = arith.constant 0 : i32
    %c0_i32_1 = arith.constant 0 : i32
    %c0_i32_2 = arith.constant 0 : i32
    %c0_i32_3 = arith.constant 0 : i32
    return %c0_i32, %c0_i32_0, %c0_i32_1, %c0_i32_2 : i32, i32, i32, i32
  }
  func.func @transform_5(%arg0: i32) -> (i32, i32) {
    %c0_i32 = arith.constant 0 : i32
    %c0_i32_0 = arith.constant 0 : i32
    %c0_i32_1 = arith.constant 0 : i32
    return %c0_i32, %c0_i32_0 : i32, i32
  }
  func.func @transform_6(%arg0: i32) -> (i32, i32) {
    %c0_i32 = arith.constant 0 : i32
    %c0_i32_0 = arith.constant 0 : i32
    %c0_i32_1 = arith.constant 0 : i32
    return %c0_i32, %c0_i32_0 : i32, i32
  }
  func.func @transform_7(%arg0: i32) -> (i32, i32, i32) {
    %c0_i32 = arith.constant 0 : i32
    %c0_i32_0 = arith.constant 0 : i32
    %c0_i32_1 = arith.constant 0 : i32
    return %arg0, %c0_i32, %c0_i32_0 : i32, i32, i32
  }
}

</mosaic_0001>

<llo_original>
// kernel: tpu_custom_call.1
$region0: #{tpu_custom_call.1}
  #allocation0 [shape = 'u32[]', space=smem, size = 0x4, offset = 0x4, fixed_abs, tag = 'smem constant byte address 0x4 - core index']
  #allocation1 [shape = 'u32[144,128]{1,0:T(1,128)}', space=vmem, size = 0x12000, scoped, tag = 'internal scratch']
  #allocation2 [shape = 'f32[1,1]{1,0:T(1,128)S(6)}', space=smem, size = 0x200, scoped, tag = 'scoped memory for tpu_custom_call.1']
  %s0 = inlined_call_operand.vmem [shape: f32[2,2], index: 0, kind: input, shape index: {}]
  %s1 = inlined_call_operand.<no memory space> [shape: f32[1,1], index: 1, kind: input, shape index: {}]
  %s2 = inlined_call_operand.hbm [shape: f32[2,32,256], index: 2, kind: input, shape index: {}]
  %s3 = inlined_call_operand.vmem [shape: f32[2,1,32], index: 3, kind: input, shape index: {}]
  %s4 = inlined_call_operand.hbm [shape: f32[4,2,32,32], index: 4, kind: input, shape index: {}]
  %s5 = inlined_call_operand.vmem [shape: f32[1,32], index: 5, kind: input, shape index: {}]
  %s6 = inlined_call_operand.vmem [shape: f32[1,32], index: 6, kind: input, shape index: {}]
  %s7 = inlined_call_operand.hbm [shape: f32[2,1,256], index: 7, kind: output, shape index: {}]
  %s8 = sld [smem:[#allocation0]]
  $region50: #{tpu_custom_call.1} parent=0
    _
  %s10 = ssub.s32 1, %s8
  %s11 = scalar_select 0, %s10, %s8
  %12 = sst [smem:[#allocation2]] %s1
  $region1: #{tpu_custom_call.1} parent=0
    #allocation3 [shape = 'u8[1024]{0}', space=smem, size = 0x400, scoped, tag = 'input window, operand 0, single buffered']
    #allocation4 [shape = 's32[1]{0}', space=sflag, size = 0x4, scoped, tag = 'scoped memory for tpu_custom_call.1']
    #allocation5 [shape = 's32[1]{0}', space=sflag, size = 0x4, scoped, tag = 'scoped memory for tpu_custom_call.1']
    #allocation6 [shape = 's32[1]{0}', space=sflag, size = 0x4, scoped, tag = 'scoped memory for tpu_custom_call.1']
    #allocation7 [shape = 'u8[65536]{0}', space=vmem, size = 0x10000, scoped, tag = 'input window, operand 2, single buffered']
    #allocation8 [shape = 'u8[131072]{0}', space=vmem, size = 0x20000, scoped, tag = 'input window, operand 4, single buffered']
    #allocation9 [shape = 's32[1]{0}', space=sflag, size = 0x4, scoped, tag = 'scoped memory for tpu_custom_call.1']
    #allocation10 [shape = 'u8[2048]{0}', space=vmem, size = 0x800, scoped, tag = 'output window, operand 0, single buffered']
    %13 = vsyncpa [#allocation6], 0
    %14 = vsyncpa [#allocation4], 0
    %15 = vsyncpa [#allocation9], 0
    %16 = vsyncpa [#allocation5], 0
    // Predicated region
    $region2: #{tpu_custom_call.1} parent=1 // pred_check
      _
    $region3: #{tpu_custom_call.1} parent=1 // pred_check_branch
      %18 = sbr.rel (0) target = $region5
    $region4: #{tpu_custom_call.1} parent=1 // pred_region
      %s20 = ssub.s32 32, 32
      %21 = vsyncadd [#allocation6], %s20
      %s23 = sshll.u32 %s0, 4
      %s24 = int_to_ptr.vmem [resolvable:$true] %s23
      %26 = dma.vmem_to_smem %s24, 32, [#allocation3], [#allocation6]
    $region5: #{tpu_custom_call.1} parent=1 // pred_fallthru
      _
    // Predicated region
    $region6: #{tpu_custom_call.1} parent=1 // pred_check
      _
    $region7: #{tpu_custom_call.1} parent=1 // pred_check_branch
      %28 = sbr.rel (0) target = $region9
    $region8: #{tpu_custom_call.1} parent=1 // pred_region
      _
    $region9: #{tpu_custom_call.1} parent=1 // pred_fallthru
      _
    // Predicated region
    $region10: #{tpu_custom_call.1} parent=1 // pred_check
      _
    $region11: #{tpu_custom_call.1} parent=1 // pred_check_branch
      %30 = sbr.rel (0) target = $region13
    $region12: #{tpu_custom_call.1} parent=1 // pred_region
      %s32 = ssub.s32 2048, 2048
      %33 = vsyncadd [#allocation4], %s32
      %s34 = sshll.u32 [#allocation7], 4
      %s35 = int_to_ptr.vmem [resolvable:$true] %s34
      %40 = dma.hbm_to_vmem [thread:$0]  %s2, 2048, %s35, [#allocation4], 256, 256, 16
    $region13: #{tpu_custom_call.1} parent=1 // pred_fallthru
      _
    // Predicated region
    $region14: #{tpu_custom_call.1} parent=1 // pred_check
      _
    $region15: #{tpu_custom_call.1} parent=1 // pred_check_branch
      %42 = sbr.rel (0) target = $region17
    $region16: #{tpu_custom_call.1} parent=1 // pred_region
      _
    $region17: #{tpu_custom_call.1} parent=1 // pred_fallthru
      _
    // Predicated region
    $region18: #{tpu_custom_call.1} parent=1 // pred_check
      _
    $region19: #{tpu_custom_call.1} parent=1 // pred_check_branch
      %44 = sbr.rel (0) target = $region21
    $region20: #{tpu_custom_call.1} parent=1 // pred_region
      %s46 = ssub.s32 4096, 4096
      %47 = vsyncadd [#allocation9], %s46
      %s48 = sshll.u32 [#allocation8], 4
      %s49 = int_to_ptr.vmem [resolvable:$true] %s48
      %54 = dma.hbm_to_vmem [thread:$0]  %s4, 4096, %s49, [#allocation9], 128, 128, 8
    $region21: #{tpu_custom_call.1} parent=1 // pred_fallthru
      _
    // Predicated region
    $region22: #{tpu_custom_call.1} parent=1 // pred_check
      _
    $region23: #{tpu_custom_call.1} parent=1 // pred_check_branch
      %56 = sbr.rel (0) target = $region25
    $region24: #{tpu_custom_call.1} parent=1 // pred_region
      _
    $region25: #{tpu_custom_call.1} parent=1 // pred_fallthru
      _
    // Predicated region
    $region26: #{tpu_custom_call.1} parent=1 // pred_check
      _
    $region27: #{tpu_custom_call.1} parent=1 // pred_check_branch
      %58 = sbr.rel (0) target = $region29
    $region28: #{tpu_custom_call.1} parent=1 // pred_region
      _
    $region29: #{tpu_custom_call.1} parent=1 // pred_fallthru
      _
    // Predicated region
    $region30: #{tpu_custom_call.1} parent=1 // pred_check
      _
    $region31: #{tpu_custom_call.1} parent=1 // pred_check_branch
      %60 = sbr.rel (0) target = $region33
    $region32: #{tpu_custom_call.1} parent=1 // pred_region
      %61 = dma.done [#allocation6], 32
    $region33: #{tpu_custom_call.1} parent=1 // pred_fallthru
      _
    // Predicated region
    $region34: #{tpu_custom_call.1} parent=1 // pred_check
      _
    $region35: #{tpu_custom_call.1} parent=1 // pred_check_branch
      %63 = sbr.rel (0) target = $region37
    $region36: #{tpu_custom_call.1} parent=1 // pred_region
      %64 = dma.done [#allocation4], 2048
    $region37: #{tpu_custom_call.1} parent=1 // pred_fallthru
      _
    // Predicated region
    $region38: #{tpu_custom_call.1} parent=1 // pred_check
      _
    $region39: #{tpu_custom_call.1} parent=1 // pred_check_branch
      %66 = sbr.rel (0) target = $region41
    $region40: #{tpu_custom_call.1} parent=1 // pred_region
      %67 = dma.done [#allocation9], 4096
    $region41: #{tpu_custom_call.1} parent=1 // pred_fallthru
      _
    %68 = sfence
    %v70 = vld [vmem:[%s5] sm:$0x1]
    %v71 = vpack.c.bf16 %v70, %v70
    %v72 = vld [vmem:[%s6] sm:$0x1]
    %v73 = vpack.c.bf16 %v72, %v72
    %s74 = sld [smem:[#allocation2]]
    %v75 = vld [vmem:[#allocation7] sm:$0xff]
    %v76 = vld [vmem:[#allocation7 + $0x8] sm:$0xff]
    %v77 = vld [vmem:[#allocation7 + $0x10] sm:$0xff]
    %v78 = vld [vmem:[#allocation7 + $0x18] sm:$0xff]
    %v79 = vld [vmem:[#allocation7 + $0x20] sm:$0xff]
    %v80 = vld [vmem:[#allocation7 + $0x28] sm:$0xff]
    %v81 = vld [vmem:[#allocation7 + $0x30] sm:$0xff]
    %v82 = vld [vmem:[#allocation7 + $0x38] sm:$0xff]
    %v83 = vpack.c.bf16 %v77, %v75
    %v84 = vpack.c.bf16 %v78, %v76
    %v85 = vpack.c.bf16 %v81, %v79
    %v86 = vpack.c.bf16 %v82, %v80
    %v87 = vld [vmem:[%s3] sm:$0x1]
    %v88 = vadd.f32 %v87, 1.0
    %s89 = sld [smem:[#allocation3]]
    %v90 = vld [vmem:[#allocation8] sm:$0xff]
    %v91 = vld [vmem:[#allocation8 + $0x8] sm:$0xff]
    %v92 = vld [vmem:[#allocation8 + $0x10] sm:$0xff]
    %v93 = vld [vmem:[#allocation8 + $0x18] sm:$0xff]
    %v94 = vstv %s89
    %v95 = vmul.f32 %v94, %v90
    %v96 = vmul.f32 %v94, %v91
    %v97 = vmul.f32 %v94, %v92
    %v98 = vmul.f32 %v94, %v93
    %s99 = sld [smem:[#allocation3 + $0x1]]
    %s100 = scalar_lea.vmem [#allocation8], 32
    %v101 = vld [vmem:[%s100] sm:$0xff]
    %v102 = vld [vmem:[%s100 + $0x8] sm:$0xff]
    %v103 = vld [vmem:[%s100 + $0x10] sm:$0xff]
    %v104 = vld [vmem:[%s100 + $0x18] sm:$0xff]
    %v105 = vstv %s99
    %v106 = vmul.f32 %v105, %v101
    %v107 = vmul.f32 %v105, %v102
    %v108 = vmul.f32 %v105, %v103
    %v109 = vmul.f32 %v105, %v104
    %v110 = vadd.f32 %v95, %v106
    %v111 = vadd.f32 %v96, %v107
    %v112 = vadd.f32 %v97, %v108
    %v113 = vadd.f32 %v98, %v109
    %v115 = vlaneseq
    %v116 = vshrl.u32 %v115, 7
    %v117 = vsub.s32 0, %v116
    %v118 = vrot.slane %v88, %v117
    %v120 = vmul.f32 %v110, %v118
    %v121 = vmul.f32 %v111, %v118
    %v122 = vmul.f32 %v112, %v118
    %v123 = vmul.f32 %v113, %v118
    %v124 = vmul.f32 %v120, %v120
    %v125 = vmul.f32 %v121, %v121
    %v126 = vmul.f32 %v122, %v122
    %v127 = vmul.f32 %v123, %v123
    %vm128 = vcmask 261120
    %v129 = vsel %vm128, %v124, 0.0
    %130 = vadd.xlane.f32.xlu0 %v129
    %v131 = vpop.xlane.xlu0 %130
    %v132 = vsel %vm128, %v125, 0.0
    %133 = vadd.xlane.f32.xlu0 %v132
    %v134 = vpop.xlane.xlu0 %133
    %v135 = vsel %vm128, %v126, 0.0
    %136 = vadd.xlane.f32.xlu0 %v135
    %v137 = vpop.xlane.xlu0 %136
    %v138 = vsel %vm128, %v127, 0.0
    %139 = vadd.xlane.f32.xlu0 %v138
    %v140 = vpop.xlane.xlu0 %139
    %v141 = vmax.f32 %v131, 1e-08
    %v142 = vmax.f32 %v134, 1e-08
    %v143 = vmax.f32 %v137, 1e-08
    %v144 = vmax.f32 %v140, 1e-08
    %v145 = vrsqrt.pop %v141
    %v146 = vrsqrt.pop %v142
    %v147 = vrsqrt.pop %v143
    %v148 = vrsqrt.pop %v144
    %v149 = vmul.f32 %v120, %v145
    %v150 = vmul.f32 %v121, %v146
    %v151 = vmul.f32 %v122, %v147
    %v152 = vmul.f32 %v123, %v148
    %v153 = vpack.c.bf16 %v150, %v149
    %v154 = vpack.c.bf16 %v152, %v151
    %v156 = vsel %vm128, %v153, 0
    %v159 = vsel %vm128, %v154, 0
    %161 = vmatprep.subr.bf16.mxu0 %v84
    %162 = vmatpush1.bf16.msra.mxu0 %v83
    %163 = vmatprep.subr.bf16.mxu0 %v86
    %164 = vmatpush1.bf16.msra.mxu0 %v85
    %165 = vmatprep.subr.bf16.mxu0 0
    %166 = vmatpush1.bf16.msra.mxu0 0
    %167 = vmatprep.subr.bf16.mxu0 0
    %168 = vmatpush1.bf16.msra.mxu0 0
    %169 = vmatprep.subr.bf16.mxu0 0
    %170 = vmatpush1.bf16.msra.mxu0 0
    %171 = vmatprep.subr.bf16.mxu0 0
    %172 = vmatpush1.bf16.msra.mxu0 0
    %173 = vmatprep.subr.bf16.mxu0 0
    %174 = vmatpush1.bf16.msra.mxu0 0
    %175 = vmatprep.subr.bf16.mxu0 0
    %176 = vmatpush1.bf16.msra.mxu0 0
    %177 = vmatprep.subr.bf16.mxu0 0
    %178 = vmatpush1.bf16.msra.mxu0 0
    %179 = vmatprep.subr.bf16.mxu0 0
    %180 = vmatpush1.bf16.msra.mxu0 0
    %181 = vmatprep.subr.bf16.mxu0 0
    %182 = vmatpush1.bf16.msra.mxu0 0
    %183 = vmatprep.subr.bf16.mxu0 0
    %184 = vmatpush1.bf16.msra.mxu0 0
    %185 = vmatprep.subr.bf16.mxu0 0
    %186 = vmatpush1.bf16.msra.mxu0 0
    %187 = vmatprep.subr.bf16.mxu0 0
    %188 = vmatpush1.bf16.msra.mxu0 0
    %189 = vmatprep.subr.bf16.mxu0 0
    %190 = vmatpush1.bf16.msra.mxu0 0
    %191 = vmatprep.subr.bf16.mxu0 0
    %192 = vmatpush1.bf16.msra.mxu0 0
    %193 = vmatprep.mubr.bf16.mxu0 0
    %194 = vmatmul.mubr.bf16.gmra.mrb[0].mxu0 %v156
    %v195 = vpop.f32.mrb[0].mxu0
    %v196 = vadd.f32 0.0, %v195
    %v197 = vpop.f32.mrb[0].mxu0
    %v198 = vadd.f32 0.0, %v197
    %v199 = vpop.f32.mrb[0].mxu0
    %v200 = vadd.f32 0.0, %v199
    %v201 = vpop.f32.mrb[0].mxu0
    %v202 = vadd.f32 0.0, %v201
    %203 = vmatprep.mubr.bf16.mxu0 0
    %204 = vmatmul.mubr.bf16.gmra.mrb[0].mxu0 %v159
    %v205 = vpop.f32.mrb[0].mxu0
    %v206 = vadd.f32 0.0, %v205
    %v207 = vpop.f32.mrb[0].mxu0
    %v208 = vadd.f32 0.0, %v207
    %v209 = vpop.f32.mrb[0].mxu0
    %v210 = vadd.f32 0.0, %v209
    %v211 = vpop.f32.mrb[0].mxu0
    %v212 = vadd.f32 0.0, %v211
    %213 = vdwg.mxu0
    %v214 = vpack.c.bf16 %v200, %v196
    %v215 = vpack.c.bf16 %v202, %v198
    %v216 = vpack.c.bf16 %v210, %v206
    %v217 = vpack.c.bf16 %v212, %v208
    %s218 = scalar_lea.vmem [#allocation8], 64
    %v219 = vld [vmem:[%s218] sm:$0xff]
    %v220 = vld [vmem:[%s218 + $0x8] sm:$0xff]
    %v221 = vld [vmem:[%s218 + $0x10] sm:$0xff]
    %v222 = vld [vmem:[%s218 + $0x18] sm:$0xff]
    %v223 = vmul.f32 %v94, %v219
    %v224 = vmul.f32 %v94, %v220
    %v225 = vmul.f32 %v94, %v221
    %v226 = vmul.f32 %v94, %v222
    %s227 = scalar_lea.vmem [#allocation8], 96
    %v228 = vld [vmem:[%s227] sm:$0xff]
    %v229 = vld [vmem:[%s227 + $0x8] sm:$0xff]
    %v230 = vld [vmem:[%s227 + $0x10] sm:$0xff]
    %v231 = vld [vmem:[%s227 + $0x18] sm:$0xff]
    %v232 = vmul.f32 %v105, %v228
    %v233 = vmul.f32 %v105, %v229
    %v234 = vmul.f32 %v105, %v230
    %v235 = vmul.f32 %v105, %v231
    %v236 = vadd.f32 %v223, %v232
    %v237 = vadd.f32 %v224, %v233
    %v238 = vadd.f32 %v225, %v234
    %v239 = vadd.f32 %v226, %v235
    %v240 = vmul.f32 %v236, %v118
    %v241 = vmul.f32 %v237, %v118
    %v242 = vmul.f32 %v238, %v118
    %v243 = vmul.f32 %v239, %v118
    %v244 = vmul.f32 %v240, %v240
    %v245 = vmul.f32 %v241, %v241
    %v246 = vmul.f32 %v242, %v242
    %v247 = vmul.f32 %v243, %v243
    %v248 = vsel %vm128, %v244, 0.0
    %249 = vadd.xlane.f32.xlu0 %v248
    %v250 = vpop.xlane.xlu0 %249
    %v251 = vsel %vm128, %v245, 0.0
    %252 = vadd.xlane.f32.xlu0 %v251
    %v253 = vpop.xlane.xlu0 %252
    %v254 = vsel %vm128, %v246, 0.0
    %255 = vadd.xlane.f32.xlu0 %v254
    %v256 = vpop.xlane.xlu0 %255
    %v257 = vsel %vm128, %v247, 0.0
    %258 = vadd.xlane.f32.xlu0 %v257
    %v259 = vpop.xlane.xlu0 %258
    %v260 = vmax.f32 %v250, 1e-08
    %v261 = vmax.f32 %v253, 1e-08
    %v262 = vmax.f32 %v256, 1e-08
    %v263 = vmax.f32 %v259, 1e-08
    %v264 = vrsqrt.pop %v260
    %v265 = vrsqrt.pop %v261
    %v266 = vrsqrt.pop %v262
    %v267 = vrsqrt.pop %v263
    %v268 = vmul.f32 %v240, %v264
    %v269 = vmul.f32 %v241, %v265
    %v270 = vmul.f32 %v242, %v266
    %v271 = vmul.f32 %v243, %v267
    %v272 = vpack.c.bf16 %v269, %v268
    %v273 = vpack.c.bf16 %v271, %v270
    %v275 = vsel %vm128, %v272, 0
    %v278 = vsel %vm128, %v273, 0
    %280 = vmatprep.subr.bf16.mxu0 %v215
    %281 = vmatpush1.bf16.msra.mxu0 %v214
    %282 = vmatprep.subr.bf16.mxu0 %v217
    %283 = vmatpush1.bf16.msra.mxu0 %v216
    %284 = vmatprep.subr.bf16.mxu0 0
    %285 = vmatpush1.bf16.msra.mxu0 0
    %286 = vmatprep.subr.bf16.mxu0 0
    %287 = vmatpush1.bf16.msra.mxu0 0
    %288 = vmatprep.subr.bf16.mxu0 0
    %289 = vmatpush1.bf16.msra.mxu0 0
    %290 = vmatprep.subr.bf16.mxu0 0
    %291 = vmatpush1.bf16.msra.mxu0 0
    %292 = vmatprep.subr.bf16.mxu0 0
    %293 = vmatpush1.bf16.msra.mxu0 0
    %294 = vmatprep.subr.bf16.mxu0 0
    %295 = vmatpush1.bf16.msra.mxu0 0
    %296 = vmatprep.subr.bf16.mxu0 0
    %297 = vmatpush1.bf16.msra.mxu0 0
    %298 = vmatprep.subr.bf16.mxu0 0
    %299 = vmatpush1.bf16.msra.mxu0 0
    %300 = vmatprep.subr.bf16.mxu0 0
    %301 = vmatpush1.bf16.msra.mxu0 0
    %302 = vmatprep.subr.bf16.mxu0 0
    %303 = vmatpush1.bf16.msra.mxu0 0
    %304 = vmatprep.subr.bf16.mxu0 0
    %305 = vmatpush1.bf16.msra.mxu0 0
    %306 = vmatprep.subr.bf16.mxu0 0
    %307 = vmatpush1.bf16.msra.mxu0 0
    %308 = vmatprep.subr.bf16.mxu0 0
    %309 = vmatpush1.bf16.msra.mxu0 0
    %310 = vmatprep.subr.bf16.mxu0 0
    %311 = vmatpush1.bf16.msra.mxu0 0
    %312 = vmatprep.mubr.bf16.mxu0 0
    %313 = vmatmul.mubr.bf16.gmra.mrb[0].mxu0 %v275
    %v314 = vpop.f32.mrb[0].mxu0
    %v315 = vadd.f32 0.0, %v314
    %v316 = vpop.f32.mrb[0].mxu0
    %v317 = vadd.f32 0.0, %v316
    %v318 = vpop.f32.mrb[0].mxu0
    %v319 = vadd.f32 0.0, %v318
    %v320 = vpop.f32.mrb[0].mxu0
    %v321 = vadd.f32 0.0, %v320
    %322 = vmatprep.mubr.bf16.mxu0 0
    %323 = vmatmul.mubr.bf16.gmra.mrb[0].mxu0 %v278
    %v324 = vpop.f32.mrb[0].mxu0
    %v325 = vadd.f32 0.0, %v324
    %v326 = vpop.f32.mrb[0].mxu0
    %v327 = vadd.f32 0.0, %v326
    %v328 = vpop.f32.mrb[0].mxu0
    %v329 = vadd.f32 0.0, %v328
    %v330 = vpop.f32.mrb[0].mxu0
    %v331 = vadd.f32 0.0, %v330
    %332 = vdwg.mxu0
    %v333 = vpack.c.bf16 %v319, %v315
    %v334 = vpack.c.bf16 %v321, %v317
    %v335 = vpack.c.bf16 %v329, %v325
    %v336 = vpack.c.bf16 %v331, %v327
    %s337 = scalar_lea.vmem [#allocation8], 128
    %v338 = vld [vmem:[%s337] sm:$0xff]
    %v339 = vld [vmem:[%s337 + $0x8] sm:$0xff]
    %v340 = vld [vmem:[%s337 + $0x10] sm:$0xff]
    %v341 = vld [vmem:[%s337 + $0x18] sm:$0xff]
    %v342 = vmul.f32 %v94, %v338
    %v343 = vmul.f32 %v94, %v339
    %v344 = vmul.f32 %v94, %v340
    %v345 = vmul.f32 %v94, %v341
    %s346 = scalar_lea.vmem [#allocation8], 160
    %v347 = vld [vmem:[%s346] sm:$0xff]
    %v348 = vld [vmem:[%s346 + $0x8] sm:$0xff]
    %v349 = vld [vmem:[%s346 + $0x10] sm:$0xff]
    %v350 = vld [vmem:[%s346 + $0x18] sm:$0xff]
    %v351 = vmul.f32 %v105, %v347
    %v352 = vmul.f32 %v105, %v348
    %v353 = vmul.f32 %v105, %v349
    %v354 = vmul.f32 %v105, %v350
    %v355 = vadd.f32 %v342, %v351
    %v356 = vadd.f32 %v343, %v352
    %v357 = vadd.f32 %v344, %v353
    %v358 = vadd.f32 %v345, %v354
    %v359 = vmul.f32 %v355, %v118
    %v360 = vmul.f32 %v356, %v118
    %v361 = vmul.f32 %v357, %v118
    %v362 = vmul.f32 %v358, %v118
    %v363 = vmul.f32 %v359, %v359
    %v364 = vmul.f32 %v360, %v360
    %v365 = vmul.f32 %v361, %v361
    %v366 = vmul.f32 %v362, %v362
    %v367 = vsel %vm128, %v363, 0.0
    %368 = vadd.xlane.f32.xlu0 %v367
    %v369 = vpop.xlane.xlu0 %368
    %v370 = vsel %vm128, %v364, 0.0
    %371 = vadd.xlane.f32.xlu0 %v370
    %v372 = vpop.xlane.xlu0 %371
    %v373 = vsel %vm128, %v365, 0.0
    %374 = vadd.xlane.f32.xlu0 %v373
    %v375 = vpop.xlane.xlu0 %374
    %v376 = vsel %vm128, %v366, 0.0
    %377 = vadd.xlane.f32.xlu0 %v376
    %v378 = vpop.xlane.xlu0 %377
    %v379 = vmax.f32 %v369, 1e-08
    %v380 = vmax.f32 %v372, 1e-08
    %v381 = vmax.f32 %v375, 1e-08
    %v382 = vmax.f32 %v378, 1e-08
    %v383 = vrsqrt.pop %v379
    %v384 = vrsqrt.pop %v380
    %v385 = vrsqrt.pop %v381
    %v386 = vrsqrt.pop %v382
    %v387 = vmul.f32 %v359, %v383
    %v388 = vmul.f32 %v360, %v384
    %v389 = vmul.f32 %v361, %v385
    %v390 = vmul.f32 %v362, %v386
    %v391 = vpack.c.bf16 %v388, %v387
    %v392 = vpack.c.bf16 %v390, %v389
    %v394 = vsel %vm128, %v391, 0
    %v397 = vsel %vm128, %v392, 0
    %399 = vmatprep.subr.bf16.mxu0 %v334
    %400 = vmatpush1.bf16.msra.mxu0 %v333
    %401 = vmatprep.subr.bf16.mxu0 %v336
    %402 = vmatpush1.bf16.msra.mxu0 %v335
    %403 = vmatprep.subr.bf16.mxu0 0
    %404 = vmatpush1.bf16.msra.mxu0 0
    %405 = vmatprep.subr.bf16.mxu0 0
    %406 = vmatpush1.bf16.msra.mxu0 0
    %407 = vmatprep.subr.bf16.mxu0 0
    %408 = vmatpush1.bf16.msra.mxu0 0
    %409 = vmatprep.subr.bf16.mxu0 0
    %410 = vmatpush1.bf16.msra.mxu0 0
    %411 = vmatprep.subr.bf16.mxu0 0
    %412 = vmatpush1.bf16.msra.mxu0 0
    %413 = vmatprep.subr.bf16.mxu0 0
    %414 = vmatpush1.bf16.msra.mxu0 0
    %415 = vmatprep.subr.bf16.mxu0 0
    %416 = vmatpush1.bf16.msra.mxu0 0
    %417 = vmatprep.subr.bf16.mxu0 0
    %418 = vmatpush1.bf16.msra.mxu0 0
    %419 = vmatprep.subr.bf16.mxu0 0
    %420 = vmatpush1.bf16.msra.mxu0 0
    %421 = vmatprep.subr.bf16.mxu0 0
    %422 = vmatpush1.bf16.msra.mxu0 0
    %423 = vmatprep.subr.bf16.mxu0 0
    %424 = vmatpush1.bf16.msra.mxu0 0
    %425 = vmatprep.subr.bf16.mxu0 0
    %426 = vmatpush1.bf16.msra.mxu0 0
    %427 = vmatprep.subr.bf16.mxu0 0
    %428 = vmatpush1.bf16.msra.mxu0 0
    %429 = vmatprep.subr.bf16.mxu0 0
    %430 = vmatpush1.bf16.msra.mxu0 0
    %431 = vmatprep.mubr.bf16.mxu0 0
    %432 = vmatmul.mubr.bf16.gmra.mrb[0].mxu0 %v394
    %v433 = vpop.f32.mrb[0].mxu0
    %v434 = vadd.f32 0.0, %v433
    %v435 = vpop.f32.mrb[0].mxu0
    %v436 = vadd.f32 0.0, %v435
    %v437 = vpop.f32.mrb[0].mxu0
    %v438 = vadd.f32 0.0, %v437
    %v439 = vpop.f32.mrb[0].mxu0
    %v440 = vadd.f32 0.0, %v439
    %441 = vmatprep.mubr.bf16.mxu0 0
    %442 = vmatmul.mubr.bf16.gmra.mrb[0].mxu0 %v397
    %v443 = vpop.f32.mrb[0].mxu0
    %v444 = vadd.f32 0.0, %v443
    %v445 = vpop.f32.mrb[0].mxu0
    %v446 = vadd.f32 0.0, %v445
    %v447 = vpop.f32.mrb[0].mxu0
    %v448 = vadd.f32 0.0, %v447
    %v449 = vpop.f32.mrb[0].mxu0
    %v450 = vadd.f32 0.0, %v449
    %451 = vdwg.mxu0
    %v452 = vpack.c.bf16 %v438, %v434
    %v453 = vpack.c.bf16 %v440, %v436
    %v454 = vpack.c.bf16 %v448, %v444
    %v455 = vpack.c.bf16 %v450, %v446
    %s456 = scalar_lea.vmem [#allocation8], 192
    %v457 = vld [vmem:[%s456] sm:$0xff]
    %v458 = vld [vmem:[%s456 + $0x8] sm:$0xff]
    %v459 = vld [vmem:[%s456 + $0x10] sm:$0xff]
    %v460 = vld [vmem:[%s456 + $0x18] sm:$0xff]
    %v461 = vmul.f32 %v94, %v457
    %v462 = vmul.f32 %v94, %v458
    %v463 = vmul.f32 %v94, %v459
    %v464 = vmul.f32 %v94, %v460
    %s465 = scalar_lea.vmem [#allocation8], 224
    %v466 = vld [vmem:[%s465] sm:$0xff]
    %v467 = vld [vmem:[%s465 + $0x8] sm:$0xff]
    %v468 = vld [vmem:[%s465 + $0x10] sm:$0xff]
    %v469 = vld [vmem:[%s465 + $0x18] sm:$0xff]
    %v470 = vmul.f32 %v105, %v466
    %v471 = vmul.f32 %v105, %v467
    %v472 = vmul.f32 %v105, %v468
    %v473 = vmul.f32 %v105, %v469
    %v474 = vadd.f32 %v461, %v470
    %v475 = vadd.f32 %v462, %v471
    %v476 = vadd.f32 %v463, %v472
    %v477 = vadd.f32 %v464, %v473
    %v478 = vmul.f32 %v474, %v118
    %v479 = vmul.f32 %v475, %v118
    %v480 = vmul.f32 %v476, %v118
    %v481 = vmul.f32 %v477, %v118
    %v482 = vmul.f32 %v478, %v478
    %v483 = vmul.f32 %v479, %v479
    %v484 = vmul.f32 %v480, %v480
    %v485 = vmul.f32 %v481, %v481
    %v486 = vsel %vm128, %v482, 0.0
    %487 = vadd.xlane.f32.xlu0 %v486
    %v488 = vpop.xlane.xlu0 %487
    %v489 = vsel %vm128, %v483, 0.0
    %490 = vadd.xlane.f32.xlu0 %v489
    %v491 = vpop.xlane.xlu0 %490
    %v492 = vsel %vm128, %v484, 0.0
    %493 = vadd.xlane.f32.xlu0 %v492
    %v494 = vpop.xlane.xlu0 %493
    %v495 = vsel %vm128, %v485, 0.0
    %496 = vadd.xlane.f32.xlu0 %v495
    %v497 = vpop.xlane.xlu0 %496
    %v498 = vmax.f32 %v488, 1e-08
    %v499 = vmax.f32 %v491, 1e-08
    %v500 = vmax.f32 %v494, 1e-08
    %v501 = vmax.f32 %v497, 1e-08
    %v502 = vrsqrt.pop %v498
    %v503 = vrsqrt.pop %v499
    %v504 = vrsqrt.pop %v500
    %v505 = vrsqrt.pop %v501
    %v506 = vmul.f32 %v478, %v502
    %v507 = vmul.f32 %v479, %v503
    %v508 = vmul.f32 %v480, %v504
    %v509 = vmul.f32 %v481, %v505
    %v510 = vpack.c.bf16 %v507, %v506
    %v511 = vpack.c.bf16 %v509, %v508
    %v513 = vsel %vm128, %v510, 0
    %v516 = vsel %vm128, %v511, 0
    %518 = vmatprep.subr.bf16.mxu0 %v453
    %519 = vmatpush1.bf16.msra.mxu0 %v452
    %520 = vmatprep.subr.bf16.mxu0 %v455
    %521 = vmatpush1.bf16.msra.mxu0 %v454
    %522 = vmatprep.subr.bf16.mxu0 0
    %523 = vmatpush1.bf16.msra.mxu0 0
    %524 = vmatprep.subr.bf16.mxu0 0
    %525 = vmatpush1.bf16.msra.mxu0 0
    %526 = vmatprep.subr.bf16.mxu0 0
    %527 = vmatpush1.bf16.msra.mxu0 0
    %528 = vmatprep.subr.bf16.mxu0 0
    %529 = vmatpush1.bf16.msra.mxu0 0
    %530 = vmatprep.subr.bf16.mxu0 0
    %531 = vmatpush1.bf16.msra.mxu0 0
    %532 = vmatprep.subr.bf16.mxu0 0
    %533 = vmatpush1.bf16.msra.mxu0 0
    %534 = vmatprep.subr.bf16.mxu0 0
    %535 = vmatpush1.bf16.msra.mxu0 0
    %536 = vmatprep.subr.bf16.mxu0 0
    %537 = vmatpush1.bf16.msra.mxu0 0
    %538 = vmatprep.subr.bf16.mxu0 0
    %539 = vmatpush1.bf16.msra.mxu0 0
    %540 = vmatprep.subr.bf16.mxu0 0
    %541 = vmatpush1.bf16.msra.mxu0 0
    %542 = vmatprep.subr.bf16.mxu0 0
    %543 = vmatpush1.bf16.msra.mxu0 0
    %544 = vmatprep.subr.bf16.mxu0 0
    %545 = vmatpush1.bf16.msra.mxu0 0
    %546 = vmatprep.subr.bf16.mxu0 0
    %547 = vmatpush1.bf16.msra.mxu0 0
    %548 = vmatprep.subr.bf16.mxu0 0
    %549 = vmatpush1.bf16.msra.mxu0 0
    %550 = vmatprep.mubr.bf16.mxu0 0
    %551 = vmatmul.mubr.bf16.gmra.mrb[0].mxu0 %v513
    %v552 = vpop.f32.mrb[0].mxu0
    %v553 = vadd.f32 0.0, %v552
    %v554 = vpop.f32.mrb[0].mxu0
    %v555 = vadd.f32 0.0, %v554
    %v556 = vpop.f32.mrb[0].mxu0
    %v557 = vadd.f32 0.0, %v556
    %v558 = vpop.f32.mrb[0].mxu0
    %v559 = vadd.f32 0.0, %v558
    %560 = vmatprep.mubr.bf16.mxu0 0
    %561 = vmatmul.mubr.bf16.gmra.mrb[0].mxu0 %v516
    %v562 = vpop.f32.mrb[0].mxu0
    %v563 = vadd.f32 0.0, %v562
    %v564 = vpop.f32.mrb[0].mxu0
    %v565 = vadd.f32 0.0, %v564
    %v566 = vpop.f32.mrb[0].mxu0
    %v567 = vadd.f32 0.0, %v566
    %v568 = vpop.f32.mrb[0].mxu0
    %v569 = vadd.f32 0.0, %v568
    %570 = vdwg.mxu0
    %v571 = vpack.c.bf16 %v557, %v553
    %v572 = vpack.c.bf16 %v559, %v555
    %v573 = vpack.c.bf16 %v567, %v563
    %v574 = vpack.c.bf16 %v569, %v565
    %v576 = vsel %vm128, %v73, 0
    %578 = vmatprep.subr.bf16.mxu0 %v84
    %579 = vmatpush1.bf16.msra.mxu0 %v83
    %580 = vmatprep.subr.bf16.mxu0 %v86
    %581 = vmatpush1.bf16.msra.mxu0 %v85
    %582 = vmatprep.subr.bf16.mxu0 0
    %583 = vmatpush1.bf16.msra.mxu0 0
    %584 = vmatprep.subr.bf16.mxu0 0
    %585 = vmatpush1.bf16.msra.mxu0 0
    %586 = vmatprep.subr.bf16.mxu0 0
    %587 = vmatpush1.bf16.msra.mxu0 0
    %588 = vmatprep.subr.bf16.mxu0 0
    %589 = vmatpush1.bf16.msra.mxu0 0
    %590 = vmatprep.subr.bf16.mxu0 0
    %591 = vmatpush1.bf16.msra.mxu0 0
    %592 = vmatprep.subr.bf16.mxu0 0
    %593 = vmatpush1.bf16.msra.mxu0 0
    %594 = vmatprep.subr.bf16.mxu0 0
    %595 = vmatpush1.bf16.msra.mxu0 0
    %596 = vmatprep.subr.bf16.mxu0 0
    %597 = vmatpush1.bf16.msra.mxu0 0
    %598 = vmatprep.subr.bf16.mxu0 0
    %599 = vmatpush1.bf16.msra.mxu0 0
    %600 = vmatprep.subr.bf16.mxu0 0
    %601 = vmatpush1.bf16.msra.mxu0 0
    %602 = vmatprep.subr.bf16.mxu0 0
    %603 = vmatpush1.bf16.msra.mxu0 0
    %604 = vmatprep.subr.bf16.mxu0 0
    %605 = vmatpush1.bf16.msra.mxu0 0
    %606 = vmatprep.subr.bf16.mxu0 0
    %607 = vmatpush1.bf16.msra.mxu0 0
    %608 = vmatprep.subr.bf16.mxu0 0
    %609 = vmatpush1.bf16.msra.mxu0 0
    %610 = vmatprep.mubr.bf16.mxu0 0
    %611 = vmatmul.mubr.bf16.gmra.mrb[0].mxu0 %v576
    %v612 = vpop.f32.mrb[0].mxu0
    %v613 = vadd.f32 0.0, %v612
    %v614 = vpop.f32.mrb[0].mxu0
    %v615 = vadd.f32 0.0, %v614
    %v616 = vpop.f32.mrb[0].mxu0
    %v617 = vpop.f32.mrb[0].mxu0
    %618 = vdwg.mxu0
    %v620 = vsel %vm128, %v71, 0
    %622 = vmatprep.subr.bf16.mxu0 %v572
    %623 = vmatpush1.bf16.msra.mxu0 %v571
    %624 = vmatprep.subr.bf16.mxu0 %v574
    %625 = vmatpush1.bf16.msra.mxu0 %v573
    %626 = vmatprep.subr.bf16.mxu0 0
    %627 = vmatpush1.bf16.msra.mxu0 0
    %628 = vmatprep.subr.bf16.mxu0 0
    %629 = vmatpush1.bf16.msra.mxu0 0
    %630 = vmatprep.subr.bf16.mxu0 0
    %631 = vmatpush1.bf16.msra.mxu0 0
    %632 = vmatprep.subr.bf16.mxu0 0
    %633 = vmatpush1.bf16.msra.mxu0 0
    %634 = vmatprep.subr.bf16.mxu0 0
    %635 = vmatpush1.bf16.msra.mxu0 0
    %636 = vmatprep.subr.bf16.mxu0 0
    %637 = vmatpush1.bf16.msra.mxu0 0
    %638 = vmatprep.subr.bf16.mxu0 0
    %639 = vmatpush1.bf16.msra.mxu0 0
    %640 = vmatprep.subr.bf16.mxu0 0
    %641 = vmatpush1.bf16.msra.mxu0 0
    %642 = vmatprep.subr.bf16.mxu0 0
    %643 = vmatpush1.bf16.msra.mxu0 0
    %644 = vmatprep.subr.bf16.mxu0 0
    %645 = vmatpush1.bf16.msra.mxu0 0
    %646 = vmatprep.subr.bf16.mxu0 0
    %647 = vmatpush1.bf16.msra.mxu0 0
    %648 = vmatprep.subr.bf16.mxu0 0
    %649 = vmatpush1.bf16.msra.mxu0 0
    %650 = vmatprep.subr.bf16.mxu0 0
    %651 = vmatpush1.bf16.msra.mxu0 0
    %652 = vmatprep.subr.bf16.mxu0 0
    %653 = vmatpush1.bf16.msra.mxu0 0
    %654 = vmatprep.mubr.bf16.mxu0 0
    %655 = vmatmul.mubr.bf16.gmra.mrb[0].mxu0 %v620
    %v656 = vpop.f32.mrb[0].mxu0
    %v657 = vadd.f32 %v613, %v656
    %v658 = vpop.f32.mrb[0].mxu0
    %v659 = vadd.f32 %v615, %v658
    %v660 = vpop.f32.mrb[0].mxu0
    %v661 = vpop.f32.mrb[0].mxu0
    %662 = vdwg.mxu0
    %v663 = vstv %s74
    %v664 = vadd.f32 %v657, %v663
    %v665 = vadd.f32 %v659, %v663
    %v668 = vcombine.low %v664, %v665
    %v670 = vunpack.c.l.s4 1966171168
    %v671 = vunpack.c.0.s8 %v670
    %v672 = vlaneseq
    %v673 = vshrl.u32 %v672, 7
    %v674 = vsub.s32 %v671, %v673
    %v675 = vrot.slane %v668, %v674
    %v677 = vunpack.c.l.s4 1966171168
    %v678 = vunpack.c.0.s8 %v677
    %v679 = vlaneseq
    %v680 = vshrl.u32 %v679, 7
    %v681 = vsub.s32 %v678, %v680
    %v682 = vrot.slane %v675, %v681
    %v684 = vlaneseq
    %vm685 = vcmp.ge.s32.totalorder %v684, 0
    %vm686 = vcmp.lt.s32.totalorder %v684, 256
    %vm687 = vmand %vm685, %vm686
    %688 = vst.msk [vmem:[#allocation10] sm:$0x3] %vm687, %v682
    %s689 = scalar_lea.vmem [#allocation7], 64
    %v690 = vld [vmem:[%s689] sm:$0xff]
    %v691 = vld [vmem:[%s689 + $0x8] sm:$0xff]
    %v692 = vld [vmem:[%s689 + $0x10] sm:$0xff]
    %v693 = vld [vmem:[%s689 + $0x18] sm:$0xff]
    %v694 = vld [vmem:[%s689 + $0x20] sm:$0xff]
    %v695 = vld [vmem:[%s689 + $0x28] sm:$0xff]
    %v696 = vld [vmem:[%s689 + $0x30] sm:$0xff]
    %v697 = vld [vmem:[%s689 + $0x38] sm:$0xff]
    %v698 = vpack.c.bf16 %v692, %v690
    %v699 = vpack.c.bf16 %v693, %v691
    %v700 = vpack.c.bf16 %v696, %v694
    %v701 = vpack.c.bf16 %v697, %v695
    %s702 = scalar_lea.vmem %s3, 1
    %v703 = vld [vmem:[%s702] sm:$0x1]
    %v704 = vadd.f32 %v703, 1.0
    %s705 = sld [smem:[#allocation3 + $0x80]]
    %v706 = vld [vmem:[#allocation8] sm:$0xff]
    %v707 = vld [vmem:[#allocation8 + $0x8] sm:$0xff]
    %v708 = vld [vmem:[#allocation8 + $0x10] sm:$0xff]
    %v709 = vld [vmem:[#allocation8 + $0x18] sm:$0xff]
    %v710 = vstv %s705
    %v711 = vmul.f32 %v710, %v706
    %v712 = vmul.f32 %v710, %v707
    %v713 = vmul.f32 %v710, %v708
    %v714 = vmul.f32 %v710, %v709
    %s715 = sld [smem:[#allocation3 + $0x81]]
    %v716 = vld [vmem:[%s100] sm:$0xff]
    %v717 = vld [vmem:[%s100 + $0x8] sm:$0xff]
    %v718 = vld [vmem:[%s100 + $0x10] sm:$0xff]
    %v719 = vld [vmem:[%s100 + $0x18] sm:$0xff]
    %v720 = vstv %s715
    %v721 = vmul.f32 %v720, %v716
    %v722 = vmul.f32 %v720, %v717
    %v723 = vmul.f32 %v720, %v718
    %v724 = vmul.f32 %v720, %v719
    %v725 = vadd.f32 %v711, %v721
    %v726 = vadd.f32 %v712, %v722
    %v727 = vadd.f32 %v713, %v723
    %v728 = vadd.f32 %v714, %v724
    %v730 = vlaneseq
    %v731 = vshrl.u32 %v730, 7
    %v732 = vsub.s32 0, %v731
    %v733 = vrot.slane %v704, %v732
    %v735 = vmul.f32 %v725, %v733
    %v736 = vmul.f32 %v726, %v733
    %v737 = vmul.f32 %v727, %v733
    %v738 = vmul.f32 %v728, %v733
    %v739 = vmul.f32 %v735, %v735
    %v740 = vmul.f32 %v736, %v736
    %v741 = vmul.f32 %v737, %v737
    %v742 = vmul.f32 %v738, %v738
    %v743 = vsel %vm128, %v739, 0.0
    %744 = vadd.xlane.f32.xlu0 %v743
    %v745 = vpop.xlane.xlu0 %744
    %v746 = vsel %vm128, %v740, 0.0
    %747 = vadd.xlane.f32.xlu0 %v746
    %v748 = vpop.xlane.xlu0 %747
    %v749 = vsel %vm128, %v741, 0.0
    %750 = vadd.xlane.f32.xlu0 %v749
    %v751 = vpop.xlane.xlu0 %750
    %v752 = vsel %vm128, %v742, 0.0
    %753 = vadd.xlane.f32.xlu0 %v752
    %v754 = vpop.xlane.xlu0 %753
    %v755 = vmax.f32 %v745, 1e-08
    %v756 = vmax.f32 %v748, 1e-08
    %v757 = vmax.f32 %v751, 1e-08
    %v758 = vmax.f32 %v754, 1e-08
    %v759 = vrsqrt.pop %v755
    %v760 = vrsqrt.pop %v756
    %v761 = vrsqrt.pop %v757
    %v762 = vrsqrt.pop %v758
    %v763 = vmul.f32 %v735, %v759
    %v764 = vmul.f32 %v736, %v760
    %v765 = vmul.f32 %v737, %v761
    %v766 = vmul.f32 %v738, %v762
    %v767 = vpack.c.bf16 %v764, %v763
    %v768 = vpack.c.bf16 %v766, %v765
    %v770 = vsel %vm128, %v767, 0
    %v773 = vsel %vm128, %v768, 0
    %775 = vmatprep.subr.bf16.mxu0 %v699
    %776 = vmatpush1.bf16.msra.mxu0 %v698
    %777 = vmatprep.subr.bf16.mxu0 %v701
    %778 = vmatpush1.bf16.msra.mxu0 %v700
    %779 = vmatprep.subr.bf16.mxu0 0
    %780 = vmatpush1.bf16.msra.mxu0 0
    %781 = vmatprep.subr.bf16.mxu0 0
    %782 = vmatpush1.bf16.msra.mxu0 0
    %783 = vmatprep.subr.bf16.mxu0 0
    %784 = vmatpush1.bf16.msra.mxu0 0
    %785 = vmatprep.subr.bf16.mxu0 0
    %786 = vmatpush1.bf16.msra.mxu0 0
    %787 = vmatprep.subr.bf16.mxu0 0
    %788 = vmatpush1.bf16.msra.mxu0 0
    %789 = vmatprep.subr.bf16.mxu0 0
    %790 = vmatpush1.bf16.msra.mxu0 0
    %791 = vmatprep.subr.bf16.mxu0 0
    %792 = vmatpush1.bf16.msra.mxu0 0
    %793 = vmatprep.subr.bf16.mxu0 0
    %794 = vmatpush1.bf16.msra.mxu0 0
    %795 = vmatprep.subr.bf16.mxu0 0
    %796 = vmatpush1.bf16.msra.mxu0 0
    %797 = vmatprep.subr.bf16.mxu0 0
    %798 = vmatpush1.bf16.msra.mxu0 0
    %799 = vmatprep.subr.bf16.mxu0 0
    %800 = vmatpush1.bf16.msra.mxu0 0
    %801 = vmatprep.subr.bf16.mxu0 0
    %802 = vmatpush1.bf16.msra.mxu0 0
    %803 = vmatprep.subr.bf16.mxu0 0
    %804 = vmatpush1.bf16.msra.mxu0 0
    %805 = vmatprep.subr.bf16.mxu0 0
    %806 = vmatpush1.bf16.msra.mxu0 0
    %807 = vmatprep.mubr.bf16.mxu0 0
    %808 = vmatmul.mubr.bf16.gmra.mrb[0].mxu0 %v770
    %v809 = vpop.f32.mrb[0].mxu0
    %v810 = vadd.f32 0.0, %v809
    %v811 = vpop.f32.mrb[0].mxu0
    %v812 = vadd.f32 0.0, %v811
    %v813 = vpop.f32.mrb[0].mxu0
    %v814 = vadd.f32 0.0, %v813
    %v815 = vpop.f32.mrb[0].mxu0
    %v816 = vadd.f32 0.0, %v815
    %817 = vmatprep.mubr.bf16.mxu0 0
    %818 = vmatmul.mubr.bf16.gmra.mrb[0].mxu0 %v773
    %v819 = vpop.f32.mrb[0].mxu0
    %v820 = vadd.f32 0.0, %v819
    %v821 = vpop.f32.mrb[0].mxu0
    %v822 = vadd.f32 0.0, %v821
    %v823 = vpop.f32.mrb[0].mxu0
    %v824 = vadd.f32 0.0, %v823
    %v825 = vpop.f32.mrb[0].mxu0
    %v826 = vadd.f32 0.0, %v825
    %827 = vdwg.mxu0
    %v828 = vpack.c.bf16 %v814, %v810
    %v829 = vpack.c.bf16 %v816, %v812
    %v830 = vpack.c.bf16 %v824, %v820
    %v831 = vpack.c.bf16 %v826, %v822
    %v832 = vld [vmem:[%s218] sm:$0xff]
    %v833 = vld [vmem:[%s218 + $0x8] sm:$0xff]
    %v834 = vld [vmem:[%s218 + $0x10] sm:$0xff]
    %v835 = vld [vmem:[%s218 + $0x18] sm:$0xff]
    %v836 = vmul.f32 %v710, %v832
    %v837 = vmul.f32 %v710, %v833
    %v838 = vmul.f32 %v710, %v834
    %v839 = vmul.f32 %v710, %v835
    %v840 = vld [vmem:[%s227] sm:$0xff]
    %v841 = vld [vmem:[%s227 + $0x8] sm:$0xff]
    %v842 = vld [vmem:[%s227 + $0x10] sm:$0xff]
    %v843 = vld [vmem:[%s227 + $0x18] sm:$0xff]
    %v844 = vmul.f32 %v720, %v840
    %v845 = vmul.f32 %v720, %v841
    %v846 = vmul.f32 %v720, %v842
    %v847 = vmul.f32 %v720, %v843
    %v848 = vadd.f32 %v836, %v844
    %v849 = vadd.f32 %v837, %v845
    %v850 = vadd.f32 %v838, %v846
    %v851 = vadd.f32 %v839, %v847
    %v852 = vmul.f32 %v848, %v733
    %v853 = vmul.f32 %v849, %v733
    %v854 = vmul.f32 %v850, %v733
    %v855 = vmul.f32 %v851, %v733
    %v856 = vmul.f32 %v852, %v852
    %v857 = vmul.f32 %v853, %v853
    %v858 = vmul.f32 %v854, %v854
    %v859 = vmul.f32 %v855, %v855
    %v860 = vsel %vm128, %v856, 0.0
    %861 = vadd.xlane.f32.xlu0 %v860
    %v862 = vpop.xlane.xlu0 %861
    %v863 = vsel %vm128, %v857, 0.0
    %864 = vadd.xlane.f32.xlu0 %v863
    %v865 = vpop.xlane.xlu0 %864
    %v866 = vsel %vm128, %v858, 0.0
    %867 = vadd.xlane.f32.xlu0 %v866
    %v868 = vpop.xlane.xlu0 %867
    %v869 = vsel %vm128, %v859, 0.0
    %870 = vadd.xlane.f32.xlu0 %v869
    %v871 = vpop.xlane.xlu0 %870
    %v872 = vmax.f32 %v862, 1e-08
    %v873 = vmax.f32 %v865, 1e-08
    %v874 = vmax.f32 %v868, 1e-08
    %v875 = vmax.f32 %v871, 1e-08
    %v876 = vrsqrt.pop %v872
    %v877 = vrsqrt.pop %v873
    %v878 = vrsqrt.pop %v874
    %v879 = vrsqrt.pop %v875
    %v880 = vmul.f32 %v852, %v876
    %v881 = vmul.f32 %v853, %v877
    %v882 = vmul.f32 %v854, %v878
    %v883 = vmul.f32 %v855, %v879
    %v884 = vpack.c.bf16 %v881, %v880
    %v885 = vpack.c.bf16 %v883, %v882
    %v887 = vsel %vm128, %v884, 0
    %v890 = vsel %vm128, %v885, 0
    %892 = vmatprep.subr.bf16.mxu0 %v829
    %893 = vmatpush1.bf16.msra.mxu0 %v828
    %894 = vmatprep.subr.bf16.mxu0 %v831
    %895 = vmatpush1.bf16.msra.mxu0 %v830
    %896 = vmatprep.subr.bf16.mxu0 0
    %897 = vmatpush1.bf16.msra.mxu0 0
    %898 = vmatprep.subr.bf16.mxu0 0
    %899 = vmatpush1.bf16.msra.mxu0 0
    %900 = vmatprep.subr.bf16.mxu0 0
    %901 = vmatpush1.bf16.msra.mxu0 0
    %902 = vmatprep.subr.bf16.mxu0 0
    %903 = vmatpush1.bf16.msra.mxu0 0
    %904 = vmatprep.subr.bf16.mxu0 0
    %905 = vmatpush1.bf16.msra.mxu0 0
    %906 = vmatprep.subr.bf16.mxu0 0
    %907 = vmatpush1.bf16.msra.mxu0 0
    %908 = vmatprep.subr.bf16.mxu0 0
    %909 = vmatpush1.bf16.msra.mxu0 0
    %910 = vmatprep.subr.bf16.mxu0 0
    %911 = vmatpush1.bf16.msra.mxu0 0
    %912 = vmatprep.subr.bf16.mxu0 0
    %913 = vmatpush1.bf16.msra.mxu0 0
    %914 = vmatprep.subr.bf16.mxu0 0
    %915 = vmatpush1.bf16.msra.mxu0 0
    %916 = vmatprep.subr.bf16.mxu0 0
    %917 = vmatpush1.bf16.msra.mxu0 0
    %918 = vmatprep.subr.bf16.mxu0 0
    %919 = vmatpush1.bf16.msra.mxu0 0
    %920 = vmatprep.subr.bf16.mxu0 0
    %921 = vmatpush1.bf16.msra.mxu0 0
    %922 = vmatprep.subr.bf16.mxu0 0
    %923 = vmatpush1.bf16.msra.mxu0 0
    %924 = vmatprep.mubr.bf16.mxu0 0
    %925 = vmatmul.mubr.bf16.gmra.mrb[0].mxu0 %v887
    %v926 = vpop.f32.mrb[0].mxu0
    %v927 = vadd.f32 0.0, %v926
    %v928 = vpop.f32.mrb[0].mxu0
    %v929 = vadd.f32 0.0, %v928
    %v930 = vpop.f32.mrb[0].mxu0
    %v931 = vadd.f32 0.0, %v930
    %v932 = vpop.f32.mrb[0].mxu0
    %v933 = vadd.f32 0.0, %v932
    %934 = vmatprep.mubr.bf16.mxu0 0
    %935 = vmatmul.mubr.bf16.gmra.mrb[0].mxu0 %v890
    %v936 = vpop.f32.mrb[0].mxu0
    %v937 = vadd.f32 0.0, %v936
    %v938 = vpop.f32.mrb[0].mxu0
    %v939 = vadd.f32 0.0, %v938
    %v940 = vpop.f32.mrb[0].mxu0
    %v941 = vadd.f32 0.0, %v940
    %v942 = vpop.f32.mrb[0].mxu0
    %v943 = vadd.f32 0.0, %v942
    %944 = vdwg.mxu0
    %v945 = vpack.c.bf16 %v931, %v927
    %v946 = vpack.c.bf16 %v933, %v929
    %v947 = vpack.c.bf16 %v941, %v937
    %v948 = vpack.c.bf16 %v943, %v939
    %v949 = vld [vmem:[%s337] sm:$0xff]
    %v950 = vld [vmem:[%s337 + $0x8] sm:$0xff]
    %v951 = vld [vmem:[%s337 + $0x10] sm:$0xff]
    %v952 = vld [vmem:[%s337 + $0x18] sm:$0xff]
    %v953 = vmul.f32 %v710, %v949
    %v954 = vmul.f32 %v710, %v950
    %v955 = vmul.f32 %v710, %v951
    %v956 = vmul.f32 %v710, %v952
    %v957 = vld [vmem:[%s346] sm:$0xff]
    %v958 = vld [vmem:[%s346 + $0x8] sm:$0xff]
    %v959 = vld [vmem:[%s346 + $0x10] sm:$0xff]
    %v960 = vld [vmem:[%s346 + $0x18] sm:$0xff]
    %v961 = vmul.f32 %v720, %v957
    %v962 = vmul.f32 %v720, %v958
    %v963 = vmul.f32 %v720, %v959
    %v964 = vmul.f32 %v720, %v960
    %v965 = vadd.f32 %v953, %v961
    %v966 = vadd.f32 %v954, %v962
    %v967 = vadd.f32 %v955, %v963
    %v968 = vadd.f32 %v956, %v964
    %v969 = vmul.f32 %v965, %v733
    %v970 = vmul.f32 %v966, %v733
    %v971 = vmul.f32 %v967, %v733
    %v972 = vmul.f32 %v968, %v733
    %v973 = vmul.f32 %v969, %v969
    %v974 = vmul.f32 %v970, %v970
    %v975 = vmul.f32 %v971, %v971
    %v976 = vmul.f32 %v972, %v972
    %v977 = vsel %vm128, %v973, 0.0
    %978 = vadd.xlane.f32.xlu0 %v977
    %v979 = vpop.xlane.xlu0 %978
    %v980 = vsel %vm128, %v974, 0.0
    %981 = vadd.xlane.f32.xlu0 %v980
    %v982 = vpop.xlane.xlu0 %981
    %v983 = vsel %vm128, %v975, 0.0
    %984 = vadd.xlane.f32.xlu0 %v983
    %v985 = vpop.xlane.xlu0 %984
    %v986 = vsel %vm128, %v976, 0.0
    %987 = vadd.xlane.f32.xlu0 %v986
    %v988 = vpop.xlane.xlu0 %987
    %v989 = vmax.f32 %v979, 1e-08
    %v990 = vmax.f32 %v982, 1e-08
    %v991 = vmax.f32 %v985, 1e-08
    %v992 = vmax.f32 %v988, 1e-08
    %v993 = vrsqrt.pop %v989
    %v994 = vrsqrt.pop %v990
    %v995 = vrsqrt.pop %v991
    %v996 = vrsqrt.pop %v992
    %v997 = vmul.f32 %v969, %v993
    %v998 = vmul.f32 %v970, %v994
    %v999 = vmul.f32 %v971, %v995
    %v1000 = vmul.f32 %v972, %v996
    %v1001 = vpack.c.bf16 %v998, %v997
    %v1002 = vpack.c.bf16 %v1000, %v999
    %v1004 = vsel %vm128, %v1001, 0
    %v1007 = vsel %vm128, %v1002, 0
    %1009 = vmatprep.subr.bf16.mxu0 %v946
    %1010 = vmatpush1.bf16.msra.mxu0 %v945
    %1011 = vmatprep.subr.bf16.mxu0 %v948
    %1012 = vmatpush1.bf16.msra.mxu0 %v947
    %1013 = vmatprep.subr.bf16.mxu0 0
    %1014 = vmatpush1.bf16.msra.mxu0 0
    %1015 = vmatprep.subr.bf16.mxu0 0
    %1016 = vmatpush1.bf16.msra.mxu0 0
    %1017 = vmatprep.subr.bf16.mxu0 0
    %1018 = vmatpush1.bf16.msra.mxu0 0
    %1019 = vmatprep.subr.bf16.mxu0 0
    %1020 = vmatpush1.bf16.msra.mxu0 0
    %1021 = vmatprep.subr.bf16.mxu0 0
    %1022 = vmatpush1.bf16.msra.mxu0 0
    %1023 = vmatprep.subr.bf16.mxu0 0
    %1024 = vmatpush1.bf16.msra.mxu0 0
    %1025 = vmatprep.subr.bf16.mxu0 0
    %1026 = vmatpush1.bf16.msra.mxu0 0
    %1027 = vmatprep.subr.bf16.mxu0 0
    %1028 = vmatpush1.bf16.msra.mxu0 0
    %1029 = vmatprep.subr.bf16.mxu0 0
    %1030 = vmatpush1.bf16.msra.mxu0 0
    %1031 = vmatprep.subr.bf16.mxu0 0
    %1032 = vmatpush1.bf16.msra.mxu0 0
    %1033 = vmatprep.subr.bf16.mxu0 0
    %1034 = vmatpush1.bf16.msra.mxu0 0
    %1035 = vmatprep.subr.bf16.mxu0 0
    %1036 = vmatpush1.bf16.msra.mxu0 0
    %1037 = vmatprep.subr.bf16.mxu0 0
    %1038 = vmatpush1.bf16.msra.mxu0 0
    %1039 = vmatprep.subr.bf16.mxu0 0
    %1040 = vmatpush1.bf16.msra.mxu0 0
    %1041 = vmatprep.mubr.bf16.mxu0 0
    %1042 = vmatmul.mubr.bf16.gmra.mrb[0].mxu0 %v1004
    %v1043 = vpop.f32.mrb[0].mxu0
    %v1044 = vadd.f32 0.0, %v1043
    %v1045 = vpop.f32.mrb[0].mxu0
    %v1046 = vadd.f32 0.0, %v1045
    %v1047 = vpop.f32.mrb[0].mxu0
    %v1048 = vadd.f32 0.0, %v1047
    %v1049 = vpop.f32.mrb[0].mxu0
    %v1050 = vadd.f32 0.0, %v1049
    %1051 = vmatprep.mubr.bf16.mxu0 0
    %1052 = vmatmul.mubr.bf16.gmra.mrb[0].mxu0 %v1007
    %v1053 = vpop.f32.mrb[0].mxu0
    %v1054 = vadd.f32 0.0, %v1053
    %v1055 = vpop.f32.mrb[0].mxu0
    %v1056 = vadd.f32 0.0, %v1055
    %v1057 = vpop.f32.mrb[0].mxu0
    %v1058 = vadd.f32 0.0, %v1057
    %v1059 = vpop.f32.mrb[0].mxu0
    %v1060 = vadd.f32 0.0, %v1059
    %1061 = vdwg.mxu0
    %v1062 = vpack.c.bf16 %v1048, %v1044
    %v1063 = vpack.c.bf16 %v1050, %v1046
    %v1064 = vpack.c.bf16 %v1058, %v1054
    %v1065 = vpack.c.bf16 %v1060, %v1056
    %v1066 = vld [vmem:[%s456] sm:$0xff]
    %v1067 = vld [vmem:[%s456 + $0x8] sm:$0xff]
    %v1068 = vld [vmem:[%s456 + $0x10] sm:$0xff]
    %v1069 = vld [vmem:[%s456 + $0x18] sm:$0xff]
    %v1070 = vmul.f32 %v710, %v1066
    %v1071 = vmul.f32 %v710, %v1067
    %v1072 = vmul.f32 %v710, %v1068
    %v1073 = vmul.f32 %v710, %v1069
    %v1074 = vld [vmem:[%s465] sm:$0xff]
    %v1075 = vld [vmem:[%s465 + $0x8] sm:$0xff]
    %v1076 = vld [vmem:[%s465 + $0x10] sm:$0xff]
    %v1077 = vld [vmem:[%s465 + $0x18] sm:$0xff]
    %v1078 = vmul.f32 %v720, %v1074
    %v1079 = vmul.f32 %v720, %v1075
    %v1080 = vmul.f32 %v720, %v1076
    %v1081 = vmul.f32 %v720, %v1077
    %v1082 = vadd.f32 %v1070, %v1078
    %v1083 = vadd.f32 %v1071, %v1079
    %v1084 = vadd.f32 %v1072, %v1080
    %v1085 = vadd.f32 %v1073, %v1081
    %v1086 = vmul.f32 %v1082, %v733
    %v1087 = vmul.f32 %v1083, %v733
    %v1088 = vmul.f32 %v1084, %v733
    %v1089 = vmul.f32 %v1085, %v733
    %v1090 = vmul.f32 %v1086, %v1086
    %v1091 = vmul.f32 %v1087, %v1087
    %v1092 = vmul.f32 %v1088, %v1088
    %v1093 = vmul.f32 %v1089, %v1089
    %v1094 = vsel %vm128, %v1090, 0.0
    %1095 = vadd.xlane.f32.xlu0 %v1094
    %v1096 = vpop.xlane.xlu0 %1095
    %v1097 = vsel %vm128, %v1091, 0.0
    %1098 = vadd.xlane.f32.xlu0 %v1097
    %v1099 = vpop.xlane.xlu0 %1098
    %v1100 = vsel %vm128, %v1092, 0.0
    %1101 = vadd.xlane.f32.xlu0 %v1100
    %v1102 = vpop.xlane.xlu0 %1101
    %v1103 = vsel %vm128, %v1093, 0.0
    %1104 = vadd.xlane.f32.xlu0 %v1103
    %v1105 = vpop.xlane.xlu0 %1104
    %v1106 = vmax.f32 %v1096, 1e-08
    %v1107 = vmax.f32 %v1099, 1e-08
    %v1108 = vmax.f32 %v1102, 1e-08
    %v1109 = vmax.f32 %v1105, 1e-08
    %v1110 = vrsqrt.pop %v1106
    %v1111 = vrsqrt.pop %v1107
    %v1112 = vrsqrt.pop %v1108
    %v1113 = vrsqrt.pop %v1109
    %v1114 = vmul.f32 %v1086, %v1110
    %v1115 = vmul.f32 %v1087, %v1111
    %v1116 = vmul.f32 %v1088, %v1112
    %v1117 = vmul.f32 %v1089, %v1113
    %v1118 = vpack.c.bf16 %v1115, %v1114
    %v1119 = vpack.c.bf16 %v1117, %v1116
    %v1121 = vsel %vm128, %v1118, 0
    %v1124 = vsel %vm128, %v1119, 0
    %1126 = vmatprep.subr.bf16.mxu0 %v1063
    %1127 = vmatpush1.bf16.msra.mxu0 %v1062
    %1128 = vmatprep.subr.bf16.mxu0 %v1065
    %1129 = vmatpush1.bf16.msra.mxu0 %v1064
    %1130 = vmatprep.subr.bf16.mxu0 0
    %1131 = vmatpush1.bf16.msra.mxu0 0
    %1132 = vmatprep.subr.bf16.mxu0 0
    %1133 = vmatpush1.bf16.msra.mxu0 0
    %1134 = vmatprep.subr.bf16.mxu0 0
    %1135 = vmatpush1.bf16.msra.mxu0 0
    %1136 = vmatprep.subr.bf16.mxu0 0
    %1137 = vmatpush1.bf16.msra.mxu0 0
    %1138 = vmatprep.subr.bf16.mxu0 0
    %1139 = vmatpush1.bf16.msra.mxu0 0
    %1140 = vmatprep.subr.bf16.mxu0 0
    %1141 = vmatpush1.bf16.msra.mxu0 0
    %1142 = vmatprep.subr.bf16.mxu0 0
    %1143 = vmatpush1.bf16.msra.mxu0 0
    %1144 = vmatprep.subr.bf16.mxu0 0
    %1145 = vmatpush1.bf16.msra.mxu0 0
    %1146 = vmatprep.subr.bf16.mxu0 0
    %1147 = vmatpush1.bf16.msra.mxu0 0
    %1148 = vmatprep.subr.bf16.mxu0 0
    %1149 = vmatpush1.bf16.msra.mxu0 0
    %1150 = vmatprep.subr.bf16.mxu0 0
    %1151 = vmatpush1.bf16.msra.mxu0 0
    %1152 = vmatprep.subr.bf16.mxu0 0
    %1153 = vmatpush1.bf16.msra.mxu0 0
    %1154 = vmatprep.subr.bf16.mxu0 0
    %1155 = vmatpush1.bf16.msra.mxu0 0
    %1156 = vmatprep.subr.bf16.mxu0 0
    %1157 = vmatpush1.bf16.msra.mxu0 0
    %1158 = vmatprep.mubr.bf16.mxu0 0
    %1159 = vmatmul.mubr.bf16.gmra.mrb[0].mxu0 %v1121
    %v1160 = vpop.f32.mrb[0].mxu0
    %v1161 = vadd.f32 0.0, %v1160
    %v1162 = vpop.f32.mrb[0].mxu0
    %v1163 = vadd.f32 0.0, %v1162
    %v1164 = vpop.f32.mrb[0].mxu0
    %v1165 = vadd.f32 0.0, %v1164
    %v1166 = vpop.f32.mrb[0].mxu0
    %v1167 = vadd.f32 0.0, %v1166
    %1168 = vmatprep.mubr.bf16.mxu0 0
    %1169 = vmatmul.mubr.bf16.gmra.mrb[0].mxu0 %v1124
    %v1170 = vpop.f32.mrb[0].mxu0
    %v1171 = vadd.f32 0.0, %v1170
    %v1172 = vpop.f32.mrb[0].mxu0
    %v1173 = vadd.f32 0.0, %v1172
    %v1174 = vpop.f32.mrb[0].mxu0
    %v1175 = vadd.f32 0.0, %v1174
    %v1176 = vpop.f32.mrb[0].mxu0
    %v1177 = vadd.f32 0.0, %v1176
    %1178 = vdwg.mxu0
    %v1179 = vpack.c.bf16 %v1165, %v1161
    %v1180 = vpack.c.bf16 %v1167, %v1163
    %v1181 = vpack.c.bf16 %v1175, %v1171
    %v1182 = vpack.c.bf16 %v1177, %v1173
    %1183 = vmatprep.subr.bf16.mxu0 %v699
    %1184 = vmatpush1.bf16.msra.mxu0 %v698
    %1185 = vmatprep.subr.bf16.mxu0 %v701
    %1186 = vmatpush1.bf16.msra.mxu0 %v700
    %1187 = vmatprep.subr.bf16.mxu0 0
    %1188 = vmatpush1.bf16.msra.mxu0 0
    %1189 = vmatprep.subr.bf16.mxu0 0
    %1190 = vmatpush1.bf16.msra.mxu0 0
    %1191 = vmatprep.subr.bf16.mxu0 0
    %1192 = vmatpush1.bf16.msra.mxu0 0
    %1193 = vmatprep.subr.bf16.mxu0 0
    %1194 = vmatpush1.bf16.msra.mxu0 0
    %1195 = vmatprep.subr.bf16.mxu0 0
    %1196 = vmatpush1.bf16.msra.mxu0 0
    %1197 = vmatprep.subr.bf16.mxu0 0
    %1198 = vmatpush1.bf16.msra.mxu0 0
    %1199 = vmatprep.subr.bf16.mxu0 0
    %1200 = vmatpush1.bf16.msra.mxu0 0
    %1201 = vmatprep.subr.bf16.mxu0 0
    %1202 = vmatpush1.bf16.msra.mxu0 0
    %1203 = vmatprep.subr.bf16.mxu0 0
    %1204 = vmatpush1.bf16.msra.mxu0 0
    %1205 = vmatprep.subr.bf16.mxu0 0
    %1206 = vmatpush1.bf16.msra.mxu0 0
    %1207 = vmatprep.subr.bf16.mxu0 0
    %1208 = vmatpush1.bf16.msra.mxu0 0
    %1209 = vmatprep.subr.bf16.mxu0 0
    %1210 = vmatpush1.bf16.msra.mxu0 0
    %1211 = vmatprep.subr.bf16.mxu0 0
    %1212 = vmatpush1.bf16.msra.mxu0 0
    %1213 = vmatprep.subr.bf16.mxu0 0
    %1214 = vmatpush1.bf16.msra.mxu0 0
    %1215 = vmatprep.mubr.bf16.mxu0 0
    %1216 = vmatmul.mubr.bf16.gmra.mrb[0].mxu0 %v576
    %v1217 = vpop.f32.mrb[0].mxu0
    %v1218 = vadd.f32 0.0, %v1217
    %v1219 = vpop.f32.mrb[0].mxu0
    %v1220 = vadd.f32 0.0, %v1219
    %v1221 = vpop.f32.mrb[0].mxu0
    %v1222 = vpop.f32.mrb[0].mxu0
    %1223 = vdwg.mxu0
    %1224 = vmatprep.subr.bf16.mxu0 %v1180
    %1225 = vmatpush1.bf16.msra.mxu0 %v1179
    %1226 = vmatprep.subr.bf16.mxu0 %v1182
    %1227 = vmatpush1.bf16.msra.mxu0 %v1181
    %1228 = vmatprep.subr.bf16.mxu0 0
    %1229 = vmatpush1.bf16.msra.mxu0 0
    %1230 = vmatprep.subr.bf16.mxu0 0
    %1231 = vmatpush1.bf16.msra.mxu0 0
    %1232 = vmatprep.subr.bf16.mxu0 0
    %1233 = vmatpush1.bf16.msra.mxu0 0
    %1234 = vmatprep.subr.bf16.mxu0 0
    %1235 = vmatpush1.bf16.msra.mxu0 0
    %1236 = vmatprep.subr.bf16.mxu0 0
    %1237 = vmatpush1.bf16.msra.mxu0 0
    %1238 = vmatprep.subr.bf16.mxu0 0
    %1239 = vmatpush1.bf16.msra.mxu0 0
    %1240 = vmatprep.subr.bf16.mxu0 0
    %1241 = vmatpush1.bf16.msra.mxu0 0
    %1242 = vmatprep.subr.bf16.mxu0 0
    %1243 = vmatpush1.bf16.msra.mxu0 0
    %1244 = vmatprep.subr.bf16.mxu0 0
    %1245 = vmatpush1.bf16.msra.mxu0 0
    %1246 = vmatprep.subr.bf16.mxu0 0
    %1247 = vmatpush1.bf16.msra.mxu0 0
    %1248 = vmatprep.subr.bf16.mxu0 0
    %1249 = vmatpush1.bf16.msra.mxu0 0
    %1250 = vmatprep.subr.bf16.mxu0 0
    %1251 = vmatpush1.bf16.msra.mxu0 0
    %1252 = vmatprep.subr.bf16.mxu0 0
    %1253 = vmatpush1.bf16.msra.mxu0 0
    %1254 = vmatprep.subr.bf16.mxu0 0
    %1255 = vmatpush1.bf16.msra.mxu0 0
    %1256 = vmatprep.mubr.bf16.mxu0 0
    %1257 = vmatmul.mubr.bf16.gmra.mrb[0].mxu0 %v620
    %v1258 = vpop.f32.mrb[0].mxu0
    %v1259 = vadd.f32 %v1218, %v1258
    %v1260 = vpop.f32.mrb[0].mxu0
    %v1261 = vadd.f32 %v1220, %v1260
    %v1262 = vpop.f32.mrb[0].mxu0
    %v1263 = vpop.f32.mrb[0].mxu0
    %1264 = vdwg.mxu0
    %v1265 = vadd.f32 %v1259, %v663
    %v1266 = vadd.f32 %v1261, %v663
    %v1269 = vcombine.low %v1265, %v1266
    %v1271 = vunpack.c.l.s4 1966171168
    %v1272 = vunpack.c.0.s8 %v1271
    %v1273 = vlaneseq
    %v1274 = vshrl.u32 %v1273, 7
    %v1275 = vsub.s32 %v1272, %v1274
    %v1276 = vrot.slane %v1269, %v1275
    %v1278 = vunpack.c.l.s4 1966171168
    %v1279 = vunpack.c.0.s8 %v1278
    %v1280 = vlaneseq
    %v1281 = vshrl.u32 %v1280, 7
    %v1282 = vsub.s32 %v1279, %v1281
    %v1283 = vrot.slane %v1276, %v1282
    %s1285 = scalar_lea.vmem [#allocation10], 2
    %1286 = vst.msk [vmem:[%s1285] sm:$0x3] %vm687, %v1283
    // Predicated region
    $region42: #{tpu_custom_call.1} parent=1 // pred_check
      _
    $region43: #{tpu_custom_call.1} parent=1 // pred_check_branch
      %1288 = sbr.rel (0) target = $region45
    $region44: #{tpu_custom_call.1} parent=1 // pred_region
      %s1290 = ssub.s32 64, 64
      %1291 = vsyncadd [#allocation5], %s1290
      %s1292 = sshll.u32 [#allocation10], 4
      %s1293 = int_to_ptr.vmem [resolvable:$true] %s1292
      %1298 = dma.vmem_to_hbm [thread:$0]  %s1293, 64, %s7, [#allocation5], 32, 32, 2
    $region45: #{tpu_custom_call.1} parent=1 // pred_fallthru
      _
    // Predicated region
    $region46: #{tpu_custom_call.1} parent=1 // pred_check
      _
    $region47: #{tpu_custom_call.1} parent=1 // pred_check_branch
      %1300 = sbr.rel (0) target = $region49
    $region48: #{tpu_custom_call.1} parent=1 // pred_region
      %1301 = dma.done [#allocation5], 64
    $region49: #{tpu_custom_call.1} parent=1 // pred_fallthru
      _
    %1302 = vsyncpa [#allocation4], 1
    %1303 = vsyncpa [#allocation9], 1
    %1304 = vsyncpa [#allocation5], 1
    %1305 = vsyncpa [#allocation6], 1

</llo_original>
